<compile_context>
chip_gen: v7x
topology: tpu7x:2x2x1
jax: 0.10.0
libtpu: 0.0.40
codegen_flags: <defaults>
</compile_context>

<pallas_src>
import jax
import jax.numpy as jnp
from jax import lax
from jax.experimental import pallas as pl
from jax.experimental.pallas import tpu as pltpu


def _encoder_kernel(x_ref, w_fused_ref, bias_ref, wax_ref, xt_ref, xe_ref):
    # x_ref:       (T-1, tb, N)   time-major input series (one batch tile)
    # w_fused_ref: (N+H, 4H)      bf16, [W_ih^T ; W_hh^T] fused LSTM weight
    # bias_ref:    (1, 4H)        f32, b_ih + b_hh folded
    # wax_ref:     (T-1, 1, 1)    attention weights on the X history part
    # xt_ref:      (T-1, tb, N)   output X_tilde (time-major)
    # xe_ref:      (T-1, tb, H)   output X_encoded (time-major)
    Tm1, tb, N = x_ref.shape
    H = xe_ref.shape[2]

    # ---------- loop-invariant preparation (hoisted out of the recurrence) ----------
    w_fused = w_fused_ref[...]                       # (N+H, 4H) bf16
    bias = bias_ref[...]                             # (1, 4H)  f32

    x_all = x_ref[...]                               # (T-1, tb, N)
    # logits[b,i] = sum_t w_x[t] * X[b,t,i]   (h/s/bias terms drop out of the softmax:
    # they are constant along the input_size axis -> shift-invariance, see header)
    term_x = jnp.sum(x_all * wax_ref[...], axis=0)   # (tb, N)
    m = jnp.max(term_x, axis=1, keepdims=True)
    p = jnp.exp(term_x - m)
    denom = jnp.sum(p, axis=1, keepdims=True)
    alpha = p * pl.reciprocal(denom, approx=True)    # (tb, N), EUP reciprocal

    # X_tilde for every step at once: single whole-block store (lane-dense vs. T-1
    # masked per-step stores).
    xt_ref[...] = alpha[None, :, :] * x_all

    h0 = jnp.zeros((tb, H), jnp.float32)
    c0 = jnp.zeros((tb, H), jnp.float32)

    def step(t, carry):
        h, c = carry
        x_tilde = xt_ref[t]                          # (tb, N) — leading-axis index
        # single fused MXU call per step: [x_tilde | h] @ [W_ih^T ; W_hh^T]
        inp = jnp.concatenate([x_tilde, h], axis=1).astype(jnp.bfloat16)
        gates = jnp.dot(inp, w_fused, preferred_element_type=jnp.float32) + bias
        # PyTorch LSTM gate order: i, f, g, o — elementwise math kept in f32
        i_g = jax.nn.sigmoid(gates[:, 0:H])
        f_g = jax.nn.sigmoid(gates[:, H:2 * H])
        g_g = jnp.tanh(gates[:, 2 * H:3 * H])
        o_g = jax.nn.sigmoid(gates[:, 3 * H:4 * H])
        c_new = f_g * c + i_g * g_g
        h_new = o_g * jnp.tanh(c_new)
        xe_ref[t] = h_new
        return (h_new, c_new)

    if Tm1 <= 32:
        # Fully unrolled recurrence: straight-line code, static ref indices,
        # maximal LLO scheduler visibility.
        carry = (h0, c0)
        for t in range(Tm1):
            carry = step(t, carry)
    else:
        lax.fori_loop(0, Tm1, step, (h0, c0), unroll=8)


def _pick_batch_tile(B):
    if B <= 256:
        return B
    for cand in (256, 128, 64, 32, 16, 8):
        if B % cand == 0:
            return cand
    return B


def encoder_forward(X, params, T, input_size, hidden):
    """Pallas equivalent of Encoder.forward. X: (B, T-1, input_size) float32."""
    B = X.shape[0]
    Tm1 = T - 1
    N = input_size
    H = hidden

    x_tm = jnp.transpose(X.astype(jnp.float32), (1, 0, 2))           # (T-1, B, N)

    w_ih, w_hh = params["w_ih"], params["w_hh"]                      # (4H, N), (4H, H)
    b_ih, b_hh = params["b_ih"], params["b_hh"]                      # (4H,)
    w_attn = params["w_attn"]                                        # (1, 2H + T-1)

    # Fused LSTM weight/bias (one MXU call per step); bf16 operands for the MXU.
    w_fused = jnp.concatenate([jnp.transpose(w_ih), jnp.transpose(w_hh)],
                              axis=0).astype(jnp.bfloat16)           # (N+H, 4H)
    bias = (b_ih + b_hh).reshape(1, 4 * H).astype(jnp.float32)       # (1, 4H)
    # Only the X-history part of the attention weight affects the output (softmax
    # shift-invariance along the input_size axis); w_attn[:, :2H] and b_attn drop out.
    wax = w_attn[0, 2 * H:].reshape(Tm1, 1, 1).astype(jnp.float32)   # (T-1, 1, 1)

    tb = _pick_batch_tile(B)
    grid = (B // tb,)

    x_tilde_tm, x_encoded_tm = pl.pallas_call(
        _encoder_kernel,
        grid=grid,
        out_shape=(jax.ShapeDtypeStruct((Tm1, B, N), jnp.float32),
                   jax.ShapeDtypeStruct((Tm1, B, H), jnp.float32)),
        in_specs=[
            pl.BlockSpec((Tm1, tb, N), lambda b: (0, b, 0)),
            pl.BlockSpec((N + H, 4 * H), lambda b: (0, 0)),
            pl.BlockSpec((1, 4 * H), lambda b: (0, 0)),
            pl.BlockSpec((Tm1, 1, 1), lambda b: (0, 0, 0)),
        ],
        out_specs=(
            pl.BlockSpec((Tm1, tb, N), lambda b: (0, b, 0)),
            pl.BlockSpec((Tm1, tb, H), lambda b: (0, b, 0)),
        ),
        compiler_params=pltpu.CompilerParams(dimension_semantics=("parallel",)),
    )(x_tm, w_fused, bias, wax)

    X_tilde = jnp.transpose(x_tilde_tm, (1, 0, 2))                   # (B, T-1, N)
    X_encoded = jnp.transpose(x_encoded_tm, (1, 0, 2))               # (B, T-1, H)
    return X_tilde, X_encoded


def encoder_forward_ref(X, params, T, input_size, hidden):
    """Pure-JAX reference mirroring the PyTorch forward exactly (full per-step attention)."""
    B = X.shape[0]
    Tm1 = T - 1
    N = input_size
    H = hidden
    h = jnp.zeros((B, H), jnp.float32)
    s = jnp.zeros((B, H), jnp.float32)
    xts, xes = [], []
    xp = jnp.transpose(X, (0, 2, 1))                                  # (B, N, T-1)
    for t in range(Tm1):
        hr = jnp.broadcast_to(h[:, None, :], (B, N, H))
        sr = jnp.broadcast_to(s[:, None, :], (B, N, H))
        cat = jnp.concatenate([hr, sr, xp], axis=2)                   # (B, N, 2H+T-1)
        e = cat.reshape(-1, 2 * H + Tm1) @ params["w_attn"].T + params["b_attn"]
        alpha = jax.nn.softmax(e.reshape(B, N), axis=1)
        x_tilde = alpha * X[:, t, :]
        gates = (x_tilde @ params["w_ih"].T + params["b_ih"]
                 + h @ params["w_hh"].T + params["b_hh"])
        i_g = jax.nn.sigmoid(gates[:, :H])
        f_g = jax.nn.sigmoid(gates[:, H:2 * H])
        g_g = jnp.tanh(gates[:, 2 * H:3 * H])
        o_g = jax.nn.sigmoid(gates[:, 3 * H:])
        s = f_g * s + i_g * g_g
        h = o_g * jnp.tanh(s)
        xts.append(x_tilde)
        xes.append(h)
    return jnp.stack(xts, axis=1), jnp.stack(xes, axis=1)


if __name__ == "__main__":
    T = 10            # -> T-1 = 9 recurrence steps
    input_size = 8
    hidden = 16
    batch = 4

    key = jax.random.PRNGKey(0)
    ks = jax.random.split(key, 8)
    s_lstm = 1.0 / float(jnp.sqrt(hidden))
    s_attn = 1.0 / float(jnp.sqrt(2 * hidden + T - 1))
    params = {
        "w_ih": jax.random.uniform(ks[0], (4 * hidden, input_size), jnp.float32, -s_lstm, s_lstm),
        "w_hh": jax.random.uniform(ks[1], (4 * hidden, hidden), jnp.float32, -s_lstm, s_lstm),
        "b_ih": jax.random.uniform(ks[2], (4 * hidden,), jnp.float32, -s_lstm, s_lstm),
        "b_hh": jax.random.uniform(ks[3], (4 * hidden,), jnp.float32, -s_lstm, s_lstm),
        "w_attn": jax.random.uniform(ks[4], (1, 2 * hidden + T - 1), jnp.float32, -s_attn, s_attn),
        "b_attn": jax.random.uniform(ks[5], (1,), jnp.float32, -s_attn, s_attn),
    }
    X = jax.random.normal(ks[6], (batch, T - 1, input_size), jnp.float32)

    X_tilde, X_encoded = encoder_forward(X, params, T, input_size, hidden)
    jax.block_until_ready((X_tilde, X_encoded))

    Xt_ref, Xe_ref = encoder_forward_ref(X, params, T, input_size, hidden)
    err = max(float(jnp.max(jnp.abs(X_tilde - Xt_ref))),
              float(jnp.max(jnp.abs(X_encoded - Xe_ref))))
    assert err < 5e-2, f"max abs error too large: {err}"
    print("KERNEL_OK")
</pallas_src>

<mosaic_0001>
module attributes {stable_mosaic.version = 11 : i64} {
  func.func @_encoder_kernel(%arg0: i32, %arg1: memref<9x4x8xf32, #tpu.memory_space<vmem>>, %arg2: memref<24x64xbf16, #tpu.memory_space<vmem>>, %arg3: memref<1x64xf32, #tpu.memory_space<vmem>>, %arg4: memref<9x1x1xf32, #tpu.memory_space<vmem>>, %arg5: memref<9x4x8xf32, #tpu.memory_space<vmem>>, %arg6: memref<9x4x16xf32, #tpu.memory_space<vmem>>) attributes {dimension_semantics = [#tpu.dimension_semantics<parallel>], iteration_bounds = array<i64: 1>, scalar_prefetch = 0 : i64, scratch_operands = 0 : i64, tpu.core_type = #tpu.core_type<tc>, window_params = [{transform_indices = @transform_0, window_bounds = array<i64: 9, 4, 8>}, {pipeline_mode = #tpu.pipeline_mode<synchronous>, transform_indices = @transform_1, window_bounds = array<i64: 24, 64>}, {pipeline_mode = #tpu.pipeline_mode<synchronous>, transform_indices = @transform_2, window_bounds = array<i64: 1, 64>}, {pipeline_mode = #tpu.pipeline_mode<synchronous>, transform_indices = @transform_3, window_bounds = array<i64: 9, 1, 1>}, {transform_indices = @transform_4, window_bounds = array<i64: 9, 4, 8>}, {transform_indices = @transform_5, window_bounds = array<i64: 9, 4, 16>}]} {
    %c0 = arith.constant 0 : index
    %c0_0 = arith.constant 0 : index
    %0 = vector.load %arg2[%c0, %c0_0] : memref<24x64xbf16, #tpu.memory_space<vmem>>, vector<24x64xbf16>
    %c0_1 = arith.constant 0 : index
    %c0_2 = arith.constant 0 : index
    %1 = vector.load %arg3[%c0_1, %c0_2] : memref<1x64xf32, #tpu.memory_space<vmem>>, vector<1x64xf32>
    %c0_3 = arith.constant 0 : index
    %c0_4 = arith.constant 0 : index
    %c0_5 = arith.constant 0 : index
    %2 = vector.load %arg1[%c0_3, %c0_4, %c0_5] : memref<9x4x8xf32, #tpu.memory_space<vmem>>, vector<9x4x8xf32>
    %c0_6 = arith.constant 0 : index
    %c0_7 = arith.constant 0 : index
    %c0_8 = arith.constant 0 : index
    %3 = vector.load %arg4[%c0_6, %c0_7, %c0_8] : memref<9x1x1xf32, #tpu.memory_space<vmem>>, vector<9x1x1xf32>
    %4 = vector.broadcast %3 : vector<9x1x1xf32> to vector<9x4x8xf32>
    %5 = arith.mulf %2, %4 : vector<9x4x8xf32>
    %cst = arith.constant dense<0.000000e+00> : vector<4x8xf32>
    %6 = vector.multi_reduction <add>, %5, %cst [0] : vector<9x4x8xf32> to vector<4x8xf32>
    %cst_9 = arith.constant dense<0xFF800000> : vector<4xf32>
    %7 = vector.multi_reduction <maximumf>, %6, %cst_9 [1] : vector<4x8xf32> to vector<4xf32>
    %8 = vector.shape_cast %7 : vector<4xf32> to vector<4x1xf32>
    %9 = vector.broadcast %8 : vector<4x1xf32> to vector<4x8xf32>
    %10 = arith.subf %6, %9 : vector<4x8xf32>
    %11 = math.exp %10 : vector<4x8xf32>
    %cst_10 = arith.constant dense<0.000000e+00> : vector<4xf32>
    %12 = vector.multi_reduction <add>, %11, %cst_10 [1] : vector<4x8xf32> to vector<4xf32>
    %13 = vector.shape_cast %12 : vector<4xf32> to vector<4x1xf32>
    %14 = tpu.reciprocal %13 {approx = true} : vector<4x1xf32> -> vector<4x1xf32>
    %15 = vector.broadcast %14 : vector<4x1xf32> to vector<4x8xf32>
    %16 = arith.mulf %11, %15 : vector<4x8xf32>
    %17 = vector.shape_cast %16 : vector<4x8xf32> to vector<1x4x8xf32>
    %18 = vector.broadcast %17 : vector<1x4x8xf32> to vector<9x4x8xf32>
    %19 = arith.mulf %18, %2 : vector<9x4x8xf32>
    %c0_11 = arith.constant 0 : index
    %c0_12 = arith.constant 0 : index
    %c0_13 = arith.constant 0 : index
    %20 = vector.load %arg5[%c0_11, %c0_12, %c0_13] : memref<9x4x8xf32, #tpu.memory_space<vmem>>, vector<9x4x8xf32>
    tpu.vector_store %arg5[%c0_11, %c0_12, %c0_13], %19 {strides = array<i32>} : memref<9x4x8xf32, #tpu.memory_space<vmem>>, vector<9x4x8xf32>,
    %cst_14 = arith.constant 0.000000e+00 : f32
    %21 = vector.broadcast %cst_14 : f32 to vector<4x16xf32>
    %cst_15 = arith.constant 0.000000e+00 : f32
    %22 = vector.broadcast %cst_15 : f32 to vector<4x16xf32>
    %c0_16 = arith.constant 0 : index
    %c0_17 = arith.constant 0 : index
    %c0_18 = arith.constant 0 : index
    %23 = vector.load %arg5[%c0_16, %c0_17, %c0_18] : memref<9x4x8xf32, #tpu.memory_space<vmem>>, vector<1x4x8xf32>
    %24 = vector.shape_cast %23 : vector<1x4x8xf32> to vector<4x8xf32>
    %25 = tpu.concatenate %24, %21 in 1 : vector<4x8xf32>, vector<4x16xf32> -> vector<4x24xf32>
    %26 = arith.truncf %25 : vector<4x24xf32> to vector<4x24xbf16>
    %cst_19 = arith.constant dense<0.000000e+00> : vector<4x64xf32>
    %27 = tpu.matmul %26, %0, %cst_19 {dimension_numbers = #tpu.dot_dimension_numbers<[1], [0], [0], [1], [0, 0, 1, 1], [], []>} : vector<4x24xbf16>, vector<24x64xbf16>, vector<4x64xf32> -> vector<4x64xf32>
    %28 = vector.broadcast %1 : vector<1x64xf32> to vector<4x64xf32>
    %29 = arith.addf %27, %28 : vector<4x64xf32>
    %30 = vector.extract_strided_slice %29 {offsets = [0, 0], sizes = [4, 16], strides = [1, 1]} : vector<4x64xf32> to vector<4x16xf32>
    %31 = arith.negf %30 : vector<4x16xf32>
    %32 = math.exp %31 : vector<4x16xf32>
    %cst_20 = arith.constant 1.000000e+00 : f32
    %33 = vector.broadcast %cst_20 : f32 to vector<4x16xf32>
    %34 = arith.addf %33, %32 : vector<4x16xf32>
    %35 = arith.divf %33, %34 : vector<4x16xf32>
    %36 = vector.extract_strided_slice %29 {offsets = [0, 16], sizes = [4, 16], strides = [1, 1]} : vector<4x64xf32> to vector<4x16xf32>
    %37 = arith.negf %36 : vector<4x16xf32>
    %38 = math.exp %37 : vector<4x16xf32>
    %cst_21 = arith.constant 1.000000e+00 : f32
    %39 = vector.broadcast %cst_21 : f32 to vector<4x16xf32>
    %40 = arith.addf %39, %38 : vector<4x16xf32>
    %41 = arith.divf %39, %40 : vector<4x16xf32>
    %42 = vector.extract_strided_slice %29 {offsets = [0, 32], sizes = [4, 16], strides = [1, 1]} : vector<4x64xf32> to vector<4x16xf32>
    %43 = math.tanh %42 : vector<4x16xf32>
    %44 = vector.extract_strided_slice %29 {offsets = [0, 48], sizes = [4, 16], strides = [1, 1]} : vector<4x64xf32> to vector<4x16xf32>
    %45 = arith.negf %44 : vector<4x16xf32>
    %46 = math.exp %45 : vector<4x16xf32>
    %cst_22 = arith.constant 1.000000e+00 : f32
    %47 = vector.broadcast %cst_22 : f32 to vector<4x16xf32>
    %48 = arith.addf %47, %46 : vector<4x16xf32>
    %49 = arith.divf %47, %48 : vector<4x16xf32>
    %50 = arith.mulf %41, %22 : vector<4x16xf32>
    %51 = arith.mulf %35, %43 : vector<4x16xf32>
    %52 = arith.addf %50, %51 : vector<4x16xf32>
    %53 = math.tanh %52 : vector<4x16xf32>
    %54 = arith.mulf %49, %53 : vector<4x16xf32>
    %c0_23 = arith.constant 0 : index
    %c0_24 = arith.constant 0 : index
    %c0_25 = arith.constant 0 : index
    %55 = vector.load %arg6[%c0_23, %c0_24, %c0_25] : memref<9x4x16xf32, #tpu.memory_space<vmem>>, vector<1x4x16xf32>
    %56 = vector.shape_cast %55 : vector<1x4x16xf32> to vector<4x16xf32>
    %57 = vector.shape_cast %54 : vector<4x16xf32> to vector<1x4x16xf32>
    tpu.vector_store %arg6[%c0_23, %c0_24, %c0_25], %57 {strides = array<i32>} : memref<9x4x16xf32, #tpu.memory_space<vmem>>, vector<1x4x16xf32>,
    %c1 = arith.constant 1 : index
    %c0_26 = arith.constant 0 : index
    %c0_27 = arith.constant 0 : index
    %58 = vector.load %arg5[%c1, %c0_26, %c0_27] : memref<9x4x8xf32, #tpu.memory_space<vmem>>, vector<1x4x8xf32>
    %59 = vector.shape_cast %58 : vector<1x4x8xf32> to vector<4x8xf32>
    %60 = tpu.concatenate %59, %54 in 1 : vector<4x8xf32>, vector<4x16xf32> -> vector<4x24xf32>
    %61 = arith.truncf %60 : vector<4x24xf32> to vector<4x24xbf16>
    %cst_28 = arith.constant dense<0.000000e+00> : vector<4x64xf32>
    %62 = tpu.matmul %61, %0, %cst_28 {dimension_numbers = #tpu.dot_dimension_numbers<[1], [0], [0], [1], [0, 0, 1, 1], [], []>} : vector<4x24xbf16>, vector<24x64xbf16>, vector<4x64xf32> -> vector<4x64xf32>
    %63 = vector.broadcast %1 : vector<1x64xf32> to vector<4x64xf32>
    %64 = arith.addf %62, %63 : vector<4x64xf32>
    %65 = vector.extract_strided_slice %64 {offsets = [0, 0], sizes = [4, 16], strides = [1, 1]} : vector<4x64xf32> to vector<4x16xf32>
    %66 = arith.negf %65 : vector<4x16xf32>
    %67 = math.exp %66 : vector<4x16xf32>
    %cst_29 = arith.constant 1.000000e+00 : f32
    %68 = vector.broadcast %cst_29 : f32 to vector<4x16xf32>
    %69 = arith.addf %68, %67 : vector<4x16xf32>
    %70 = arith.divf %68, %69 : vector<4x16xf32>
    %71 = vector.extract_strided_slice %64 {offsets = [0, 16], sizes = [4, 16], strides = [1, 1]} : vector<4x64xf32> to vector<4x16xf32>
    %72 = arith.negf %71 : vector<4x16xf32>
    %73 = math.exp %72 : vector<4x16xf32>
    %cst_30 = arith.constant 1.000000e+00 : f32
    %74 = vector.broadcast %cst_30 : f32 to vector<4x16xf32>
    %75 = arith.addf %74, %73 : vector<4x16xf32>
    %76 = arith.divf %74, %75 : vector<4x16xf32>
    %77 = vector.extract_strided_slice %64 {offsets = [0, 32], sizes = [4, 16], strides = [1, 1]} : vector<4x64xf32> to vector<4x16xf32>
    %78 = math.tanh %77 : vector<4x16xf32>
    %79 = vector.extract_strided_slice %64 {offsets = [0, 48], sizes = [4, 16], strides = [1, 1]} : vector<4x64xf32> to vector<4x16xf32>
    %80 = arith.negf %79 : vector<4x16xf32>
    %81 = math.exp %80 : vector<4x16xf32>
    %cst_31 = arith.constant 1.000000e+00 : f32
    %82 = vector.broadcast %cst_31 : f32 to vector<4x16xf32>
    %83 = arith.addf %82, %81 : vector<4x16xf32>
    %84 = arith.divf %82, %83 : vector<4x16xf32>
    %85 = arith.mulf %76, %52 : vector<4x16xf32>
    %86 = arith.mulf %70, %78 : vector<4x16xf32>
    %87 = arith.addf %85, %86 : vector<4x16xf32>
    %88 = math.tanh %87 : vector<4x16xf32>
    %89 = arith.mulf %84, %88 : vector<4x16xf32>
    %c1_32 = arith.constant 1 : index
    %c0_33 = arith.constant 0 : index
    %c0_34 = arith.constant 0 : index
    %90 = vector.load %arg6[%c1_32, %c0_33, %c0_34] : memref<9x4x16xf32, #tpu.memory_space<vmem>>, vector<1x4x16xf32>
    %91 = vector.shape_cast %90 : vector<1x4x16xf32> to vector<4x16xf32>
    %92 = vector.shape_cast %89 : vector<4x16xf32> to vector<1x4x16xf32>
    tpu.vector_store %arg6[%c1_32, %c0_33, %c0_34], %92 {strides = array<i32>} : memref<9x4x16xf32, #tpu.memory_space<vmem>>, vector<1x4x16xf32>,
    %c2 = arith.constant 2 : index
    %c0_35 = arith.constant 0 : index
    %c0_36 = arith.constant 0 : index
    %93 = vector.load %arg5[%c2, %c0_35, %c0_36] : memref<9x4x8xf32, #tpu.memory_space<vmem>>, vector<1x4x8xf32>
    %94 = vector.shape_cast %93 : vector<1x4x8xf32> to vector<4x8xf32>
    %95 = tpu.concatenate %94, %89 in 1 : vector<4x8xf32>, vector<4x16xf32> -> vector<4x24xf32>
    %96 = arith.truncf %95 : vector<4x24xf32> to vector<4x24xbf16>
    %cst_37 = arith.constant dense<0.000000e+00> : vector<4x64xf32>
    %97 = tpu.matmul %96, %0, %cst_37 {dimension_numbers = #tpu.dot_dimension_numbers<[1], [0], [0], [1], [0, 0, 1, 1], [], []>} : vector<4x24xbf16>, vector<24x64xbf16>, vector<4x64xf32> -> vector<4x64xf32>
    %98 = vector.broadcast %1 : vector<1x64xf32> to vector<4x64xf32>
    %99 = arith.addf %97, %98 : vector<4x64xf32>
    %100 = vector.extract_strided_slice %99 {offsets = [0, 0], sizes = [4, 16], strides = [1, 1]} : vector<4x64xf32> to vector<4x16xf32>
    %101 = arith.negf %100 : vector<4x16xf32>
    %102 = math.exp %101 : vector<4x16xf32>
    %cst_38 = arith.constant 1.000000e+00 : f32
    %103 = vector.broadcast %cst_38 : f32 to vector<4x16xf32>
    %104 = arith.addf %103, %102 : vector<4x16xf32>
    %105 = arith.divf %103, %104 : vector<4x16xf32>
    %106 = vector.extract_strided_slice %99 {offsets = [0, 16], sizes = [4, 16], strides = [1, 1]} : vector<4x64xf32> to vector<4x16xf32>
    %107 = arith.negf %106 : vector<4x16xf32>
    %108 = math.exp %107 : vector<4x16xf32>
    %cst_39 = arith.constant 1.000000e+00 : f32
    %109 = vector.broadcast %cst_39 : f32 to vector<4x16xf32>
    %110 = arith.addf %109, %108 : vector<4x16xf32>
    %111 = arith.divf %109, %110 : vector<4x16xf32>
    %112 = vector.extract_strided_slice %99 {offsets = [0, 32], sizes = [4, 16], strides = [1, 1]} : vector<4x64xf32> to vector<4x16xf32>
    %113 = math.tanh %112 : vector<4x16xf32>
    %114 = vector.extract_strided_slice %99 {offsets = [0, 48], sizes = [4, 16], strides = [1, 1]} : vector<4x64xf32> to vector<4x16xf32>
    %115 = arith.negf %114 : vector<4x16xf32>
    %116 = math.exp %115 : vector<4x16xf32>
    %cst_40 = arith.constant 1.000000e+00 : f32
    %117 = vector.broadcast %cst_40 : f32 to vector<4x16xf32>
    %118 = arith.addf %117, %116 : vector<4x16xf32>
    %119 = arith.divf %117, %118 : vector<4x16xf32>
    %120 = arith.mulf %111, %87 : vector<4x16xf32>
    %121 = arith.mulf %105, %113 : vector<4x16xf32>
    %122 = arith.addf %120, %121 : vector<4x16xf32>
    %123 = math.tanh %122 : vector<4x16xf32>
    %124 = arith.mulf %119, %123 : vector<4x16xf32>
    %c2_41 = arith.constant 2 : index
    %c0_42 = arith.constant 0 : index
    %c0_43 = arith.constant 0 : index
    %125 = vector.load %arg6[%c2_41, %c0_42, %c0_43] : memref<9x4x16xf32, #tpu.memory_space<vmem>>, vector<1x4x16xf32>
    %126 = vector.shape_cast %125 : vector<1x4x16xf32> to vector<4x16xf32>
    %127 = vector.shape_cast %124 : vector<4x16xf32> to vector<1x4x16xf32>
    tpu.vector_store %arg6[%c2_41, %c0_42, %c0_43], %127 {strides = array<i32>} : memref<9x4x16xf32, #tpu.memory_space<vmem>>, vector<1x4x16xf32>,
    %c3 = arith.constant 3 : index
    %c0_44 = arith.constant 0 : index
    %c0_45 = arith.constant 0 : index
    %128 = vector.load %arg5[%c3, %c0_44, %c0_45] : memref<9x4x8xf32, #tpu.memory_space<vmem>>, vector<1x4x8xf32>
    %129 = vector.shape_cast %128 : vector<1x4x8xf32> to vector<4x8xf32>
    %130 = tpu.concatenate %129, %124 in 1 : vector<4x8xf32>, vector<4x16xf32> -> vector<4x24xf32>
    %131 = arith.truncf %130 : vector<4x24xf32> to vector<4x24xbf16>
    %cst_46 = arith.constant dense<0.000000e+00> : vector<4x64xf32>
    %132 = tpu.matmul %131, %0, %cst_46 {dimension_numbers = #tpu.dot_dimension_numbers<[1], [0], [0], [1], [0, 0, 1, 1], [], []>} : vector<4x24xbf16>, vector<24x64xbf16>, vector<4x64xf32> -> vector<4x64xf32>
    %133 = vector.broadcast %1 : vector<1x64xf32> to vector<4x64xf32>
    %134 = arith.addf %132, %133 : vector<4x64xf32>
    %135 = vector.extract_strided_slice %134 {offsets = [0, 0], sizes = [4, 16], strides = [1, 1]} : vector<4x64xf32> to vector<4x16xf32>
    %136 = arith.negf %135 : vector<4x16xf32>
    %137 = math.exp %136 : vector<4x16xf32>
    %cst_47 = arith.constant 1.000000e+00 : f32
    %138 = vector.broadcast %cst_47 : f32 to vector<4x16xf32>
    %139 = arith.addf %138, %137 : vector<4x16xf32>
    %140 = arith.divf %138, %139 : vector<4x16xf32>
    %141 = vector.extract_strided_slice %134 {offsets = [0, 16], sizes = [4, 16], strides = [1, 1]} : vector<4x64xf32> to vector<4x16xf32>
    %142 = arith.negf %141 : vector<4x16xf32>
    %143 = math.exp %142 : vector<4x16xf32>
    %cst_48 = arith.constant 1.000000e+00 : f32
    %144 = vector.broadcast %cst_48 : f32 to vector<4x16xf32>
    %145 = arith.addf %144, %143 : vector<4x16xf32>
    %146 = arith.divf %144, %145 : vector<4x16xf32>
    %147 = vector.extract_strided_slice %134 {offsets = [0, 32], sizes = [4, 16], strides = [1, 1]} : vector<4x64xf32> to vector<4x16xf32>
    %148 = math.tanh %147 : vector<4x16xf32>
    %149 = vector.extract_strided_slice %134 {offsets = [0, 48], sizes = [4, 16], strides = [1, 1]} : vector<4x64xf32> to vector<4x16xf32>
    %150 = arith.negf %149 : vector<4x16xf32>
    %151 = math.exp %150 : vector<4x16xf32>
    %cst_49 = arith.constant 1.000000e+00 : f32
    %152 = vector.broadcast %cst_49 : f32 to vector<4x16xf32>
    %153 = arith.addf %152, %151 : vector<4x16xf32>
    %154 = arith.divf %152, %153 : vector<4x16xf32>
    %155 = arith.mulf %146, %122 : vector<4x16xf32>
    %156 = arith.mulf %140, %148 : vector<4x16xf32>
    %157 = arith.addf %155, %156 : vector<4x16xf32>
    %158 = math.tanh %157 : vector<4x16xf32>
    %159 = arith.mulf %154, %158 : vector<4x16xf32>
    %c3_50 = arith.constant 3 : index
    %c0_51 = arith.constant 0 : index
    %c0_52 = arith.constant 0 : index
    %160 = vector.load %arg6[%c3_50, %c0_51, %c0_52] : memref<9x4x16xf32, #tpu.memory_space<vmem>>, vector<1x4x16xf32>
    %161 = vector.shape_cast %160 : vector<1x4x16xf32> to vector<4x16xf32>
    %162 = vector.shape_cast %159 : vector<4x16xf32> to vector<1x4x16xf32>
    tpu.vector_store %arg6[%c3_50, %c0_51, %c0_52], %162 {strides = array<i32>} : memref<9x4x16xf32, #tpu.memory_space<vmem>>, vector<1x4x16xf32>,
    %c4 = arith.constant 4 : index
    %c0_53 = arith.constant 0 : index
    %c0_54 = arith.constant 0 : index
    %163 = vector.load %arg5[%c4, %c0_53, %c0_54] : memref<9x4x8xf32, #tpu.memory_space<vmem>>, vector<1x4x8xf32>
    %164 = vector.shape_cast %163 : vector<1x4x8xf32> to vector<4x8xf32>
    %165 = tpu.concatenate %164, %159 in 1 : vector<4x8xf32>, vector<4x16xf32> -> vector<4x24xf32>
    %166 = arith.truncf %165 : vector<4x24xf32> to vector<4x24xbf16>
    %cst_55 = arith.constant dense<0.000000e+00> : vector<4x64xf32>
    %167 = tpu.matmul %166, %0, %cst_55 {dimension_numbers = #tpu.dot_dimension_numbers<[1], [0], [0], [1], [0, 0, 1, 1], [], []>} : vector<4x24xbf16>, vector<24x64xbf16>, vector<4x64xf32> -> vector<4x64xf32>
    %168 = vector.broadcast %1 : vector<1x64xf32> to vector<4x64xf32>
    %169 = arith.addf %167, %168 : vector<4x64xf32>
    %170 = vector.extract_strided_slice %169 {offsets = [0, 0], sizes = [4, 16], strides = [1, 1]} : vector<4x64xf32> to vector<4x16xf32>
    %171 = arith.negf %170 : vector<4x16xf32>
    %172 = math.exp %171 : vector<4x16xf32>
    %cst_56 = arith.constant 1.000000e+00 : f32
    %173 = vector.broadcast %cst_56 : f32 to vector<4x16xf32>
    %174 = arith.addf %173, %172 : vector<4x16xf32>
    %175 = arith.divf %173, %174 : vector<4x16xf32>
    %176 = vector.extract_strided_slice %169 {offsets = [0, 16], sizes = [4, 16], strides = [1, 1]} : vector<4x64xf32> to vector<4x16xf32>
    %177 = arith.negf %176 : vector<4x16xf32>
    %178 = math.exp %177 : vector<4x16xf32>
    %cst_57 = arith.constant 1.000000e+00 : f32
    %179 = vector.broadcast %cst_57 : f32 to vector<4x16xf32>
    %180 = arith.addf %179, %178 : vector<4x16xf32>
    %181 = arith.divf %179, %180 : vector<4x16xf32>
    %182 = vector.extract_strided_slice %169 {offsets = [0, 32], sizes = [4, 16], strides = [1, 1]} : vector<4x64xf32> to vector<4x16xf32>
    %183 = math.tanh %182 : vector<4x16xf32>
    %184 = vector.extract_strided_slice %169 {offsets = [0, 48], sizes = [4, 16], strides = [1, 1]} : vector<4x64xf32> to vector<4x16xf32>
    %185 = arith.negf %184 : vector<4x16xf32>
    %186 = math.exp %185 : vector<4x16xf32>
    %cst_58 = arith.constant 1.000000e+00 : f32
    %187 = vector.broadcast %cst_58 : f32 to vector<4x16xf32>
    %188 = arith.addf %187, %186 : vector<4x16xf32>
    %189 = arith.divf %187, %188 : vector<4x16xf32>
    %190 = arith.mulf %181, %157 : vector<4x16xf32>
    %191 = arith.mulf %175, %183 : vector<4x16xf32>
    %192 = arith.addf %190, %191 : vector<4x16xf32>
    %193 = math.tanh %192 : vector<4x16xf32>
    %194 = arith.mulf %189, %193 : vector<4x16xf32>
    %c4_59 = arith.constant 4 : index
    %c0_60 = arith.constant 0 : index
    %c0_61 = arith.constant 0 : index
    %195 = vector.load %arg6[%c4_59, %c0_60, %c0_61] : memref<9x4x16xf32, #tpu.memory_space<vmem>>, vector<1x4x16xf32>
    %196 = vector.shape_cast %195 : vector<1x4x16xf32> to vector<4x16xf32>
    %197 = vector.shape_cast %194 : vector<4x16xf32> to vector<1x4x16xf32>
    tpu.vector_store %arg6[%c4_59, %c0_60, %c0_61], %197 {strides = array<i32>} : memref<9x4x16xf32, #tpu.memory_space<vmem>>, vector<1x4x16xf32>,
    %c5 = arith.constant 5 : index
    %c0_62 = arith.constant 0 : index
    %c0_63 = arith.constant 0 : index
    %198 = vector.load %arg5[%c5, %c0_62, %c0_63] : memref<9x4x8xf32, #tpu.memory_space<vmem>>, vector<1x4x8xf32>
    %199 = vector.shape_cast %198 : vector<1x4x8xf32> to vector<4x8xf32>
    %200 = tpu.concatenate %199, %194 in 1 : vector<4x8xf32>, vector<4x16xf32> -> vector<4x24xf32>
    %201 = arith.truncf %200 : vector<4x24xf32> to vector<4x24xbf16>
    %cst_64 = arith.constant dense<0.000000e+00> : vector<4x64xf32>
    %202 = tpu.matmul %201, %0, %cst_64 {dimension_numbers = #tpu.dot_dimension_numbers<[1], [0], [0], [1], [0, 0, 1, 1], [], []>} : vector<4x24xbf16>, vector<24x64xbf16>, vector<4x64xf32> -> vector<4x64xf32>
    %203 = vector.broadcast %1 : vector<1x64xf32> to vector<4x64xf32>
    %204 = arith.addf %202, %203 : vector<4x64xf32>
    %205 = vector.extract_strided_slice %204 {offsets = [0, 0], sizes = [4, 16], strides = [1, 1]} : vector<4x64xf32> to vector<4x16xf32>
    %206 = arith.negf %205 : vector<4x16xf32>
    %207 = math.exp %206 : vector<4x16xf32>
    %cst_65 = arith.constant 1.000000e+00 : f32
    %208 = vector.broadcast %cst_65 : f32 to vector<4x16xf32>
    %209 = arith.addf %208, %207 : vector<4x16xf32>
    %210 = arith.divf %208, %209 : vector<4x16xf32>
    %211 = vector.extract_strided_slice %204 {offsets = [0, 16], sizes = [4, 16], strides = [1, 1]} : vector<4x64xf32> to vector<4x16xf32>
    %212 = arith.negf %211 : vector<4x16xf32>
    %213 = math.exp %212 : vector<4x16xf32>
    %cst_66 = arith.constant 1.000000e+00 : f32
    %214 = vector.broadcast %cst_66 : f32 to vector<4x16xf32>
    %215 = arith.addf %214, %213 : vector<4x16xf32>
    %216 = arith.divf %214, %215 : vector<4x16xf32>
    %217 = vector.extract_strided_slice %204 {offsets = [0, 32], sizes = [4, 16], strides = [1, 1]} : vector<4x64xf32> to vector<4x16xf32>
    %218 = math.tanh %217 : vector<4x16xf32>
    %219 = vector.extract_strided_slice %204 {offsets = [0, 48], sizes = [4, 16], strides = [1, 1]} : vector<4x64xf32> to vector<4x16xf32>
    %220 = arith.negf %219 : vector<4x16xf32>
    %221 = math.exp %220 : vector<4x16xf32>
    %cst_67 = arith.constant 1.000000e+00 : f32
    %222 = vector.broadcast %cst_67 : f32 to vector<4x16xf32>
    %223 = arith.addf %222, %221 : vector<4x16xf32>
    %224 = arith.divf %222, %223 : vector<4x16xf32>
    %225 = arith.mulf %216, %192 : vector<4x16xf32>
    %226 = arith.mulf %210, %218 : vector<4x16xf32>
    %227 = arith.addf %225, %226 : vector<4x16xf32>
    %228 = math.tanh %227 : vector<4x16xf32>
    %229 = arith.mulf %224, %228 : vector<4x16xf32>
    %c5_68 = arith.constant 5 : index
    %c0_69 = arith.constant 0 : index
    %c0_70 = arith.constant 0 : index
    %230 = vector.load %arg6[%c5_68, %c0_69, %c0_70] : memref<9x4x16xf32, #tpu.memory_space<vmem>>, vector<1x4x16xf32>
    %231 = vector.shape_cast %230 : vector<1x4x16xf32> to vector<4x16xf32>
    %232 = vector.shape_cast %229 : vector<4x16xf32> to vector<1x4x16xf32>
    tpu.vector_store %arg6[%c5_68, %c0_69, %c0_70], %232 {strides = array<i32>} : memref<9x4x16xf32, #tpu.memory_space<vmem>>, vector<1x4x16xf32>,
    %c6 = arith.constant 6 : index
    %c0_71 = arith.constant 0 : index
    %c0_72 = arith.constant 0 : index
    %233 = vector.load %arg5[%c6, %c0_71, %c0_72] : memref<9x4x8xf32, #tpu.memory_space<vmem>>, vector<1x4x8xf32>
    %234 = vector.shape_cast %233 : vector<1x4x8xf32> to vector<4x8xf32>
    %235 = tpu.concatenate %234, %229 in 1 : vector<4x8xf32>, vector<4x16xf32> -> vector<4x24xf32>
    %236 = arith.truncf %235 : vector<4x24xf32> to vector<4x24xbf16>
    %cst_73 = arith.constant dense<0.000000e+00> : vector<4x64xf32>
    %237 = tpu.matmul %236, %0, %cst_73 {dimension_numbers = #tpu.dot_dimension_numbers<[1], [0], [0], [1], [0, 0, 1, 1], [], []>} : vector<4x24xbf16>, vector<24x64xbf16>, vector<4x64xf32> -> vector<4x64xf32>
    %238 = vector.broadcast %1 : vector<1x64xf32> to vector<4x64xf32>
    %239 = arith.addf %237, %238 : vector<4x64xf32>
    %240 = vector.extract_strided_slice %239 {offsets = [0, 0], sizes = [4, 16], strides = [1, 1]} : vector<4x64xf32> to vector<4x16xf32>
    %241 = arith.negf %240 : vector<4x16xf32>
    %242 = math.exp %241 : vector<4x16xf32>
    %cst_74 = arith.constant 1.000000e+00 : f32
    %243 = vector.broadcast %cst_74 : f32 to vector<4x16xf32>
    %244 = arith.addf %243, %242 : vector<4x16xf32>
    %245 = arith.divf %243, %244 : vector<4x16xf32>
    %246 = vector.extract_strided_slice %239 {offsets = [0, 16], sizes = [4, 16], strides = [1, 1]} : vector<4x64xf32> to vector<4x16xf32>
    %247 = arith.negf %246 : vector<4x16xf32>
    %248 = math.exp %247 : vector<4x16xf32>
    %cst_75 = arith.constant 1.000000e+00 : f32
    %249 = vector.broadcast %cst_75 : f32 to vector<4x16xf32>
    %250 = arith.addf %249, %248 : vector<4x16xf32>
    %251 = arith.divf %249, %250 : vector<4x16xf32>
    %252 = vector.extract_strided_slice %239 {offsets = [0, 32], sizes = [4, 16], strides = [1, 1]} : vector<4x64xf32> to vector<4x16xf32>
    %253 = math.tanh %252 : vector<4x16xf32>
    %254 = vector.extract_strided_slice %239 {offsets = [0, 48], sizes = [4, 16], strides = [1, 1]} : vector<4x64xf32> to vector<4x16xf32>
    %255 = arith.negf %254 : vector<4x16xf32>
    %256 = math.exp %255 : vector<4x16xf32>
    %cst_76 = arith.constant 1.000000e+00 : f32
    %257 = vector.broadcast %cst_76 : f32 to vector<4x16xf32>
    %258 = arith.addf %257, %256 : vector<4x16xf32>
    %259 = arith.divf %257, %258 : vector<4x16xf32>
    %260 = arith.mulf %251, %227 : vector<4x16xf32>
    %261 = arith.mulf %245, %253 : vector<4x16xf32>
    %262 = arith.addf %260, %261 : vector<4x16xf32>
    %263 = math.tanh %262 : vector<4x16xf32>
    %264 = arith.mulf %259, %263 : vector<4x16xf32>
    %c6_77 = arith.constant 6 : index
    %c0_78 = arith.constant 0 : index
    %c0_79 = arith.constant 0 : index
    %265 = vector.load %arg6[%c6_77, %c0_78, %c0_79] : memref<9x4x16xf32, #tpu.memory_space<vmem>>, vector<1x4x16xf32>
    %266 = vector.shape_cast %265 : vector<1x4x16xf32> to vector<4x16xf32>
    %267 = vector.shape_cast %264 : vector<4x16xf32> to vector<1x4x16xf32>
    tpu.vector_store %arg6[%c6_77, %c0_78, %c0_79], %267 {strides = array<i32>} : memref<9x4x16xf32, #tpu.memory_space<vmem>>, vector<1x4x16xf32>,
    %c7 = arith.constant 7 : index
    %c0_80 = arith.constant 0 : index
    %c0_81 = arith.constant 0 : index
    %268 = vector.load %arg5[%c7, %c0_80, %c0_81] : memref<9x4x8xf32, #tpu.memory_space<vmem>>, vector<1x4x8xf32>
    %269 = vector.shape_cast %268 : vector<1x4x8xf32> to vector<4x8xf32>
    %270 = tpu.concatenate %269, %264 in 1 : vector<4x8xf32>, vector<4x16xf32> -> vector<4x24xf32>
    %271 = arith.truncf %270 : vector<4x24xf32> to vector<4x24xbf16>
    %cst_82 = arith.constant dense<0.000000e+00> : vector<4x64xf32>
    %272 = tpu.matmul %271, %0, %cst_82 {dimension_numbers = #tpu.dot_dimension_numbers<[1], [0], [0], [1], [0, 0, 1, 1], [], []>} : vector<4x24xbf16>, vector<24x64xbf16>, vector<4x64xf32> -> vector<4x64xf32>
    %273 = vector.broadcast %1 : vector<1x64xf32> to vector<4x64xf32>
    %274 = arith.addf %272, %273 : vector<4x64xf32>
    %275 = vector.extract_strided_slice %274 {offsets = [0, 0], sizes = [4, 16], strides = [1, 1]} : vector<4x64xf32> to vector<4x16xf32>
    %276 = arith.negf %275 : vector<4x16xf32>
    %277 = math.exp %276 : vector<4x16xf32>
    %cst_83 = arith.constant 1.000000e+00 : f32
    %278 = vector.broadcast %cst_83 : f32 to vector<4x16xf32>
    %279 = arith.addf %278, %277 : vector<4x16xf32>
    %280 = arith.divf %278, %279 : vector<4x16xf32>
    %281 = vector.extract_strided_slice %274 {offsets = [0, 16], sizes = [4, 16], strides = [1, 1]} : vector<4x64xf32> to vector<4x16xf32>
    %282 = arith.negf %281 : vector<4x16xf32>
    %283 = math.exp %282 : vector<4x16xf32>
    %cst_84 = arith.constant 1.000000e+00 : f32
    %284 = vector.broadcast %cst_84 : f32 to vector<4x16xf32>
    %285 = arith.addf %284, %283 : vector<4x16xf32>
    %286 = arith.divf %284, %285 : vector<4x16xf32>
    %287 = vector.extract_strided_slice %274 {offsets = [0, 32], sizes = [4, 16], strides = [1, 1]} : vector<4x64xf32> to vector<4x16xf32>
    %288 = math.tanh %287 : vector<4x16xf32>
    %289 = vector.extract_strided_slice %274 {offsets = [0, 48], sizes = [4, 16], strides = [1, 1]} : vector<4x64xf32> to vector<4x16xf32>
    %290 = arith.negf %289 : vector<4x16xf32>
    %291 = math.exp %290 : vector<4x16xf32>
    %cst_85 = arith.constant 1.000000e+00 : f32
    %292 = vector.broadcast %cst_85 : f32 to vector<4x16xf32>
    %293 = arith.addf %292, %291 : vector<4x16xf32>
    %294 = arith.divf %292, %293 : vector<4x16xf32>
    %295 = arith.mulf %286, %262 : vector<4x16xf32>
    %296 = arith.mulf %280, %288 : vector<4x16xf32>
    %297 = arith.addf %295, %296 : vector<4x16xf32>
    %298 = math.tanh %297 : vector<4x16xf32>
    %299 = arith.mulf %294, %298 : vector<4x16xf32>
    %c7_86 = arith.constant 7 : index
    %c0_87 = arith.constant 0 : index
    %c0_88 = arith.constant 0 : index
    %300 = vector.load %arg6[%c7_86, %c0_87, %c0_88] : memref<9x4x16xf32, #tpu.memory_space<vmem>>, vector<1x4x16xf32>
    %301 = vector.shape_cast %300 : vector<1x4x16xf32> to vector<4x16xf32>
    %302 = vector.shape_cast %299 : vector<4x16xf32> to vector<1x4x16xf32>
    tpu.vector_store %arg6[%c7_86, %c0_87, %c0_88], %302 {strides = array<i32>} : memref<9x4x16xf32, #tpu.memory_space<vmem>>, vector<1x4x16xf32>,
    %c8 = arith.constant 8 : index
    %c0_89 = arith.constant 0 : index
    %c0_90 = arith.constant 0 : index
    %303 = vector.load %arg5[%c8, %c0_89, %c0_90] : memref<9x4x8xf32, #tpu.memory_space<vmem>>, vector<1x4x8xf32>
    %304 = vector.shape_cast %303 : vector<1x4x8xf32> to vector<4x8xf32>
    %305 = tpu.concatenate %304, %299 in 1 : vector<4x8xf32>, vector<4x16xf32> -> vector<4x24xf32>
    %306 = arith.truncf %305 : vector<4x24xf32> to vector<4x24xbf16>
    %cst_91 = arith.constant dense<0.000000e+00> : vector<4x64xf32>
    %307 = tpu.matmul %306, %0, %cst_91 {dimension_numbers = #tpu.dot_dimension_numbers<[1], [0], [0], [1], [0, 0, 1, 1], [], []>} : vector<4x24xbf16>, vector<24x64xbf16>, vector<4x64xf32> -> vector<4x64xf32>
    %308 = vector.broadcast %1 : vector<1x64xf32> to vector<4x64xf32>
    %309 = arith.addf %307, %308 : vector<4x64xf32>
    %310 = vector.extract_strided_slice %309 {offsets = [0, 0], sizes = [4, 16], strides = [1, 1]} : vector<4x64xf32> to vector<4x16xf32>
    %311 = arith.negf %310 : vector<4x16xf32>
    %312 = math.exp %311 : vector<4x16xf32>
    %cst_92 = arith.constant 1.000000e+00 : f32
    %313 = vector.broadcast %cst_92 : f32 to vector<4x16xf32>
    %314 = arith.addf %313, %312 : vector<4x16xf32>
    %315 = arith.divf %313, %314 : vector<4x16xf32>
    %316 = vector.extract_strided_slice %309 {offsets = [0, 16], sizes = [4, 16], strides = [1, 1]} : vector<4x64xf32> to vector<4x16xf32>
    %317 = arith.negf %316 : vector<4x16xf32>
    %318 = math.exp %317 : vector<4x16xf32>
    %cst_93 = arith.constant 1.000000e+00 : f32
    %319 = vector.broadcast %cst_93 : f32 to vector<4x16xf32>
    %320 = arith.addf %319, %318 : vector<4x16xf32>
    %321 = arith.divf %319, %320 : vector<4x16xf32>
    %322 = vector.extract_strided_slice %309 {offsets = [0, 32], sizes = [4, 16], strides = [1, 1]} : vector<4x64xf32> to vector<4x16xf32>
    %323 = math.tanh %322 : vector<4x16xf32>
    %324 = vector.extract_strided_slice %309 {offsets = [0, 48], sizes = [4, 16], strides = [1, 1]} : vector<4x64xf32> to vector<4x16xf32>
    %325 = arith.negf %324 : vector<4x16xf32>
    %326 = math.exp %325 : vector<4x16xf32>
    %cst_94 = arith.constant 1.000000e+00 : f32
    %327 = vector.broadcast %cst_94 : f32 to vector<4x16xf32>
    %328 = arith.addf %327, %326 : vector<4x16xf32>
    %329 = arith.divf %327, %328 : vector<4x16xf32>
    %330 = arith.mulf %321, %297 : vector<4x16xf32>
    %331 = arith.mulf %315, %323 : vector<4x16xf32>
    %332 = arith.addf %330, %331 : vector<4x16xf32>
    %333 = math.tanh %332 : vector<4x16xf32>
    %334 = arith.mulf %329, %333 : vector<4x16xf32>
    %c8_95 = arith.constant 8 : index
    %c0_96 = arith.constant 0 : index
    %c0_97 = arith.constant 0 : index
    %335 = vector.load %arg6[%c8_95, %c0_96, %c0_97] : memref<9x4x16xf32, #tpu.memory_space<vmem>>, vector<1x4x16xf32>
    %336 = vector.shape_cast %335 : vector<1x4x16xf32> to vector<4x16xf32>
    %337 = vector.shape_cast %334 : vector<4x16xf32> to vector<1x4x16xf32>
    tpu.vector_store %arg6[%c8_95, %c0_96, %c0_97], %337 {strides = array<i32>} : memref<9x4x16xf32, #tpu.memory_space<vmem>>, vector<1x4x16xf32>,
    return
  }
  func.func @transform_0(%arg0: i32) -> (i32, i32, i32) {
    %c0_i32 = arith.constant 0 : i32
    %c0_i32_0 = arith.constant 0 : i32
    %c0_i32_1 = arith.constant 0 : i32
    return %c0_i32, %arg0, %c0_i32_0 : i32, i32, i32
  }
  func.func @transform_1(%arg0: i32) -> (i32, i32) {
    %c0_i32 = arith.constant 0 : i32
    %c0_i32_0 = arith.constant 0 : i32
    %c0_i32_1 = arith.constant 0 : i32
    return %c0_i32, %c0_i32_0 : i32, i32
  }
  func.func @transform_2(%arg0: i32) -> (i32, i32) {
    %c0_i32 = arith.constant 0 : i32
    %c0_i32_0 = arith.constant 0 : i32
    %c0_i32_1 = arith.constant 0 : i32
    return %c0_i32, %c0_i32_0 : i32, i32
  }
  func.func @transform_3(%arg0: i32) -> (i32, i32, i32) {
    %c0_i32 = arith.constant 0 : i32
    %c0_i32_0 = arith.constant 0 : i32
    %c0_i32_1 = arith.constant 0 : i32
    %c0_i32_2 = arith.constant 0 : i32
    return %c0_i32, %c0_i32_0, %c0_i32_1 : i32, i32, i32
  }
  func.func @transform_4(%arg0: i32) -> (i32, i32, i32) {
    %c0_i32 = arith.constant 0 : i32
    %c0_i32_0 = arith.constant 0 : i32
    %c0_i32_1 = arith.constant 0 : i32
    return %c0_i32, %arg0, %c0_i32_0 : i32, i32, i32
  }
  func.func @transform_5(%arg0: i32) -> (i32, i32, i32) {
    %c0_i32 = arith.constant 0 : i32
    %c0_i32_0 = arith.constant 0 : i32
    %c0_i32_1 = arith.constant 0 : i32
    return %c0_i32, %arg0, %c0_i32_0 : i32, i32, i32
  }
}

</mosaic_0001>

<llo_original>
// kernel: tpu_custom_call.1
$region0: #{tpu_custom_call.1}
  #allocation0 [shape = 'u32[]', space=smem, size = 0x4, offset = 0x4, fixed_abs, tag = 'smem constant byte address 0x4 - core index']
  #allocation1 [shape = 'u32[144,128]{1,0:T(1,128)}', space=vmem, size = 0x12000, scoped, tag = 'internal scratch']
  %s0 = inlined_call_operand.vmem [shape: f32[9,4,8], index: 0, kind: input, shape index: {}]
  %s1 = inlined_call_operand.vmem [shape: bf16[24,64], index: 1, kind: input, shape index: {}]
  %s2 = inlined_call_operand.vmem [shape: f32[1,64], index: 2, kind: input, shape index: {}]
  %s3 = inlined_call_operand.vmem [shape: f32[9,1,1], index: 3, kind: input, shape index: {}]
  %s4 = inlined_call_operand.vmem [shape: f32[9,4,8], index: 4, kind: output, shape index: {0}]
  %s5 = inlined_call_operand.hbm [shape: f32[9,4,16], index: 5, kind: output, shape index: {1}]
  %6 = xla_tuple %s4, %s5
  %s7 = sld [smem:[#allocation0]]
  $region34: #{tpu_custom_call.1} parent=0
    _
  %s9 = ssub.s32 1, %s7
  %s10 = scalar_select 0, %s9, %s7
  $region1: #{tpu_custom_call.1} parent=0
    #allocation2 [shape = 'u8[18432]{0}', space=vmem, size = 0x4800, scoped, tag = 'output window, operand 1, single buffered']
    #allocation3 [shape = 's32[1]{0}', space=sflag, size = 0x4, scoped, tag = 'scoped memory for tpu_custom_call.1']
    %11 = vsyncpa [#allocation3], 0
    // Predicated region
    $region2: #{tpu_custom_call.1} parent=1 // pred_check
      _
    $region3: #{tpu_custom_call.1} parent=1 // pred_check_branch
      %13 = sbr.rel (0) target = $region5
    $region4: #{tpu_custom_call.1} parent=1 // pred_region
      _
    $region5: #{tpu_custom_call.1} parent=1 // pred_fallthru
      _
    // Predicated region
    $region6: #{tpu_custom_call.1} parent=1 // pred_check
      _
    $region7: #{tpu_custom_call.1} parent=1 // pred_check_branch
      %15 = sbr.rel (0) target = $region9
    $region8: #{tpu_custom_call.1} parent=1 // pred_region
      _
    $region9: #{tpu_custom_call.1} parent=1 // pred_fallthru
      _
    // Predicated region
    $region10: #{tpu_custom_call.1} parent=1 // pred_check
      _
    $region11: #{tpu_custom_call.1} parent=1 // pred_check_branch
      %17 = sbr.rel (0) target = $region13
    $region12: #{tpu_custom_call.1} parent=1 // pred_region
      _
    $region13: #{tpu_custom_call.1} parent=1 // pred_fallthru
      _
    // Predicated region
    $region14: #{tpu_custom_call.1} parent=1 // pred_check
      _
    $region15: #{tpu_custom_call.1} parent=1 // pred_check_branch
      %19 = sbr.rel (0) target = $region17
    $region16: #{tpu_custom_call.1} parent=1 // pred_region
      _
    $region17: #{tpu_custom_call.1} parent=1 // pred_fallthru
      _
    %v21 = vld [vmem:[%s1] sm:$0xf]
    %v22 = vld [vmem:[%s1 + $0x4] sm:$0xf]
    %v23 = vld [vmem:[%s1 + $0x8] sm:$0xf]
    %v24 = vld [vmem:[%s2] sm:$0x1]
    %v25 = vld [vmem:[%s0] sm:$0xf]
    %v26 = vld [vmem:[%s0 + $0x4] sm:$0xf]
    %v27 = vld [vmem:[%s0 + $0x8] sm:$0xf]
    %v28 = vld [vmem:[%s0 + $0xc] sm:$0xf]
    %v29 = vld [vmem:[%s0 + $0x10] sm:$0xf]
    %v30 = vld [vmem:[%s0 + $0x14] sm:$0xf]
    %v31 = vld [vmem:[%s0 + $0x18] sm:$0xf]
    %v32 = vld [vmem:[%s0 + $0x1c] sm:$0xf]
    %v33 = vld [vmem:[%s0 + $0x20] sm:$0xf]
    %v34 = vld [vmem:[%s3] sm:$0x1]
    %v35 = vld [vmem:[%s3 + $0x1] sm:$0x1]
    %v36 = vld [vmem:[%s3 + $0x2] sm:$0x1]
    %v37 = vld [vmem:[%s3 + $0x3] sm:$0x1]
    %v38 = vld [vmem:[%s3 + $0x4] sm:$0x1]
    %v39 = vld [vmem:[%s3 + $0x5] sm:$0x1]
    %v40 = vld [vmem:[%s3 + $0x6] sm:$0x1]
    %v41 = vld [vmem:[%s3 + $0x7] sm:$0x1]
    %v42 = vld [vmem:[%s3 + $0x8] sm:$0x1]
    %v52 = vlaneseq
    %v53 = vshrl.u32 %v52, 7
    %v54 = vsub.s32 0, %v53
    %v55 = vrot.slane %v34, %v54
    %v56 = vlaneseq
    %v57 = vshrl.u32 %v56, 7
    %v58 = vsub.s32 0, %v57
    %v59 = vrot.slane %v35, %v58
    %v60 = vlaneseq
    %v61 = vshrl.u32 %v60, 7
    %v62 = vsub.s32 0, %v61
    %v63 = vrot.slane %v36, %v62
    %v64 = vlaneseq
    %v65 = vshrl.u32 %v64, 7
    %v66 = vsub.s32 0, %v65
    %v67 = vrot.slane %v37, %v66
    %v68 = vlaneseq
    %v69 = vshrl.u32 %v68, 7
    %v70 = vsub.s32 0, %v69
    %v71 = vrot.slane %v38, %v70
    %v72 = vlaneseq
    %v73 = vshrl.u32 %v72, 7
    %v74 = vsub.s32 0, %v73
    %v75 = vrot.slane %v39, %v74
    %v76 = vlaneseq
    %v77 = vshrl.u32 %v76, 7
    %v78 = vsub.s32 0, %v77
    %v79 = vrot.slane %v40, %v78
    %v80 = vlaneseq
    %v81 = vshrl.u32 %v80, 7
    %v82 = vsub.s32 0, %v81
    %v83 = vrot.slane %v41, %v82
    %v84 = vlaneseq
    %v85 = vshrl.u32 %v84, 7
    %v86 = vsub.s32 0, %v85
    %v87 = vrot.slane %v42, %v86
    %88 = vset.pattern.permute.xlu0 0
    %89 = vperm.xlu0 %88, %v55
    %v90 = vpop.permute.xlu0 %89
    %92 = vset.pattern.permute.xlu0 0
    %93 = vperm.xlu0 %92, %v59
    %v94 = vpop.permute.xlu0 %93
    %96 = vset.pattern.permute.xlu0 0
    %97 = vperm.xlu0 %96, %v63
    %v98 = vpop.permute.xlu0 %97
    %100 = vset.pattern.permute.xlu0 0
    %101 = vperm.xlu0 %100, %v67
    %v102 = vpop.permute.xlu0 %101
    %104 = vset.pattern.permute.xlu0 0
    %105 = vperm.xlu0 %104, %v71
    %v106 = vpop.permute.xlu0 %105
    %108 = vset.pattern.permute.xlu0 0
    %109 = vperm.xlu0 %108, %v75
    %v110 = vpop.permute.xlu0 %109
    %112 = vset.pattern.permute.xlu0 0
    %113 = vperm.xlu0 %112, %v79
    %v114 = vpop.permute.xlu0 %113
    %116 = vset.pattern.permute.xlu0 0
    %117 = vperm.xlu0 %116, %v83
    %v118 = vpop.permute.xlu0 %117
    %120 = vset.pattern.permute.xlu0 0
    %121 = vperm.xlu0 %120, %v87
    %v122 = vpop.permute.xlu0 %121
    %v124 = vmul.f32 %v25, %v90
    %v125 = vmul.f32 %v26, %v94
    %v126 = vmul.f32 %v27, %v98
    %v127 = vmul.f32 %v28, %v102
    %v128 = vmul.f32 %v29, %v106
    %v129 = vmul.f32 %v30, %v110
    %v130 = vmul.f32 %v31, %v114
    %v131 = vmul.f32 %v32, %v118
    %v132 = vmul.f32 %v33, %v122
    %vm133 = vcmask 60416
    %v134 = vsel %vm133, %v124, 0.0
    %v135 = vsel %vm133, %v125, 0.0
    %v136 = vadd.f32 %v134, %v135
    %v137 = vsel %vm133, %v126, 0.0
    %v138 = vadd.f32 %v136, %v137
    %v139 = vsel %vm133, %v127, 0.0
    %v140 = vadd.f32 %v138, %v139
    %v141 = vsel %vm133, %v128, 0.0
    %v142 = vadd.f32 %v140, %v141
    %v143 = vsel %vm133, %v129, 0.0
    %v144 = vadd.f32 %v142, %v143
    %v145 = vsel %vm133, %v130, 0.0
    %v146 = vadd.f32 %v144, %v145
    %v147 = vsel %vm133, %v131, 0.0
    %v148 = vadd.f32 %v146, %v147
    %v149 = vsel %vm133, %v132, 0.0
    %v150 = vadd.f32 %v148, %v149
    %v151 = vsel %vm133, %v150, -inf
    %152 = vmax.xlane.f32.xlu0 %v151
    %v153 = vpop.xlane.xlu0 %152
    %v154 = vsub.f32 %v150, %v153
    %v155 = vmul.f32 %v154, 1.442695
    %v156 = vpow.pop %v155
    %v157 = vsel %vm133, %v156, 0.0
    %158 = vadd.xlane.f32.xlu0 %v157
    %v159 = vpop.xlane.xlu0 %158
    %v160 = vrcp.pop %v159
    %v161 = vmul.f32 %v156, %v160
    %v162 = vmul.f32 %v161, %v25
    %v163 = vmul.f32 %v161, %v26
    %v164 = vmul.f32 %v161, %v27
    %v165 = vmul.f32 %v161, %v28
    %v166 = vmul.f32 %v161, %v29
    %v167 = vmul.f32 %v161, %v30
    %v168 = vmul.f32 %v161, %v31
    %v169 = vmul.f32 %v161, %v32
    %v170 = vmul.f32 %v161, %v33
    %171 = vst.msk [vmem:[%s4] sm:$0xf] %vm133, %v162
    %172 = vst.msk [vmem:[%s4 + $0x4] sm:$0xf] %vm133, %v163
    %173 = vst.msk [vmem:[%s4 + $0x8] sm:$0xf] %vm133, %v164
    %174 = vst.msk [vmem:[%s4 + $0xc] sm:$0xf] %vm133, %v165
    %175 = vst.msk [vmem:[%s4 + $0x10] sm:$0xf] %vm133, %v166
    %176 = vst.msk [vmem:[%s4 + $0x14] sm:$0xf] %vm133, %v167
    %177 = vst.msk [vmem:[%s4 + $0x18] sm:$0xf] %vm133, %v168
    %178 = vst.msk [vmem:[%s4 + $0x1c] sm:$0xf] %vm133, %v169
    %179 = vst.msk [vmem:[%s4 + $0x20] sm:$0xf] %vm133, %v170
    %v180 = vld [vmem:[%s4] sm:$0xf]
    %vm181 = vcmask 64512
    %v182 = vsel %vm181, %v180, 0.0
    %v183 = vpack.c.bf16 %v182, %v182
    %v185 = vlaneseq
    %v186 = vshrl.u32 %v185, 7
    %v187 = vsub.s32 0, %v186
    %v188 = vrot.slane %v24, %v187
    %v193 = vunpack.c.l.b16 %v21
    %v194 = vunpack.c.l.b16 %v22
    %v195 = vunpack.c.l.b16 %v23
    %v196 = vpack.c.b16 %v194, %v193
    %v197 = vpack.c.b16 %v195, %v195
    %vm199 = vcmask 195584
    %v201 = vsel %vm199, %v183, 0
    %vm203 = vcmask 1043456
    %v205 = vsel %vm203, %v197, 0
    %207 = vmatprep.subr.bf16.mxu0 0
    %208 = vmatpush1.bf16.msra.mxu0 %v196
    %209 = vmatprep.subr.bf16.mxu0 0
    %210 = vmatpush1.bf16.msra.mxu0 %v205
    %211 = vmatprep.subr.bf16.mxu0 0
    %212 = vmatpush1.bf16.msra.mxu0 0
    %213 = vmatprep.subr.bf16.mxu0 0
    %214 = vmatpush1.bf16.msra.mxu0 0
    %215 = vmatprep.subr.bf16.mxu0 0
    %216 = vmatpush1.bf16.msra.mxu0 0
    %217 = vmatprep.subr.bf16.mxu0 0
    %218 = vmatpush1.bf16.msra.mxu0 0
    %219 = vmatprep.subr.bf16.mxu0 0
    %220 = vmatpush1.bf16.msra.mxu0 0
    %221 = vmatprep.subr.bf16.mxu0 0
    %222 = vmatpush1.bf16.msra.mxu0 0
    %223 = vmatprep.subr.bf16.mxu0 0
    %224 = vmatpush1.bf16.msra.mxu0 0
    %225 = vmatprep.subr.bf16.mxu0 0
    %226 = vmatpush1.bf16.msra.mxu0 0
    %227 = vmatprep.subr.bf16.mxu0 0
    %228 = vmatpush1.bf16.msra.mxu0 0
    %229 = vmatprep.subr.bf16.mxu0 0
    %230 = vmatpush1.bf16.msra.mxu0 0
    %231 = vmatprep.subr.bf16.mxu0 0
    %232 = vmatpush1.bf16.msra.mxu0 0
    %233 = vmatprep.subr.bf16.mxu0 0
    %234 = vmatpush1.bf16.msra.mxu0 0
    %235 = vmatprep.subr.bf16.mxu0 0
    %236 = vmatpush1.bf16.msra.mxu0 0
    %237 = vmatprep.subr.bf16.mxu0 0
    %238 = vmatpush1.bf16.msra.mxu0 0
    %239 = vmatprep.mubr.bf16.mxu0 0
    %240 = vmatmul.mubr.bf16.gmra.mrb[0].mxu0 %v201
    %v241 = vpop.f32.mrb[0].mxu0
    %v242 = vadd.f32 %v188, %v241
    %v243 = vpop.f32.mrb[0].mxu0
    %v244 = vpop.f32.mrb[0].mxu0
    %v245 = vpop.f32.mrb[0].mxu0
    %246 = vdwg.mxu0
    %v247 = vxor.u32 %v242, 2147483648
    %v248 = vmul.f32 %v247, 1.442695
    %v249 = vpow.pop %v248
    %v250 = vadd.f32 %v249, 1.0
    %v251 = vrcp.pop %v250
    %v252 = vmul.f32 1.0, %v251
    %v253 = vtanh.pop %v242
    %v254 = vmul.f32 %v252, 0.0
    %256 = vrot.lane.b32.xlu0 %v253, 96
    %v257 = vpop.permute.xlu0 %256
    %v259 = vmul.f32 %v252, %v257
    %261 = vrot.lane.b32.xlu0 %v259, 16
    %v262 = vpop.permute.xlu0 %261
    %v264 = vadd.f32 %v254, %v262
    %v265 = vtanh.pop %v264
    %267 = vrot.lane.b32.xlu0 %v265, 32
    %v268 = vpop.permute.xlu0 %267
    %v270 = vmul.f32 %v252, %v268
    %272 = vrot.lane.b32.xlu0 %v270, 80
    %v273 = vpop.permute.xlu0 %272
    %vm275 = vcmask 125952
    %276 = vst.msk [vmem:[#allocation2] sm:$0xf] %vm275, %v273
    %s277 = scalar_lea.vmem %s4, 4
    %v278 = vld [vmem:[%s277] sm:$0xf]
    %279 = vrot.lane.b32.xlu0 %v270, 88
    %v280 = vpop.permute.xlu0 %279
    %v282 = vsel %vm181, %v278, %v280
    %v283 = vpack.c.bf16 %v282, %v282
    %v285 = vsel %vm199, %v283, 0
    %287 = vmatprep.subr.bf16.mxu0 0
    %288 = vmatpush1.bf16.msra.mxu0 %v196
    %289 = vmatprep.subr.bf16.mxu0 0
    %290 = vmatpush1.bf16.msra.mxu0 %v205
    %291 = vmatprep.subr.bf16.mxu0 0
    %292 = vmatpush1.bf16.msra.mxu0 0
    %293 = vmatprep.subr.bf16.mxu0 0
    %294 = vmatpush1.bf16.msra.mxu0 0
    %295 = vmatprep.subr.bf16.mxu0 0
    %296 = vmatpush1.bf16.msra.mxu0 0
    %297 = vmatprep.subr.bf16.mxu0 0
    %298 = vmatpush1.bf16.msra.mxu0 0
    %299 = vmatprep.subr.bf16.mxu0 0
    %300 = vmatpush1.bf16.msra.mxu0 0
    %301 = vmatprep.subr.bf16.mxu0 0
    %302 = vmatpush1.bf16.msra.mxu0 0
    %303 = vmatprep.subr.bf16.mxu0 0
    %304 = vmatpush1.bf16.msra.mxu0 0
    %305 = vmatprep.subr.bf16.mxu0 0
    %306 = vmatpush1.bf16.msra.mxu0 0
    %307 = vmatprep.subr.bf16.mxu0 0
    %308 = vmatpush1.bf16.msra.mxu0 0
    %309 = vmatprep.subr.bf16.mxu0 0
    %310 = vmatpush1.bf16.msra.mxu0 0
    %311 = vmatprep.subr.bf16.mxu0 0
    %312 = vmatpush1.bf16.msra.mxu0 0
    %313 = vmatprep.subr.bf16.mxu0 0
    %314 = vmatpush1.bf16.msra.mxu0 0
    %315 = vmatprep.subr.bf16.mxu0 0
    %316 = vmatpush1.bf16.msra.mxu0 0
    %317 = vmatprep.subr.bf16.mxu0 0
    %318 = vmatpush1.bf16.msra.mxu0 0
    %319 = vmatprep.mubr.bf16.mxu0 0
    %320 = vmatmul.mubr.bf16.gmra.mrb[0].mxu0 %v285
    %v321 = vpop.f32.mrb[0].mxu0
    %v322 = vadd.f32 %v188, %v321
    %v323 = vpop.f32.mrb[0].mxu0
    %v324 = vpop.f32.mrb[0].mxu0
    %v325 = vpop.f32.mrb[0].mxu0
    %326 = vdwg.mxu0
    %v327 = vxor.u32 %v322, 2147483648
    %v328 = vmul.f32 %v327, 1.442695
    %v329 = vpow.pop %v328
    %v330 = vadd.f32 %v329, 1.0
    %v331 = vrcp.pop %v330
    %v332 = vmul.f32 1.0, %v331
    %v333 = vtanh.pop %v322
    %v334 = vmul.f32 %v332, %v264
    %336 = vrot.lane.b32.xlu0 %v333, 96
    %v337 = vpop.permute.xlu0 %336
    %v339 = vmul.f32 %v332, %v337
    %341 = vrot.lane.b32.xlu0 %v339, 16
    %v342 = vpop.permute.xlu0 %341
    %v344 = vadd.f32 %v334, %v342
    %v345 = vtanh.pop %v344
    %347 = vrot.lane.b32.xlu0 %v345, 32
    %v348 = vpop.permute.xlu0 %347
    %v350 = vmul.f32 %v332, %v348
    %352 = vrot.lane.b32.xlu0 %v350, 80
    %v353 = vpop.permute.xlu0 %352
    %s355 = scalar_lea.vmem [#allocation2], 4
    %356 = vst.msk [vmem:[%s355] sm:$0xf] %vm275, %v353
    %s357 = scalar_lea.vmem %s4, 8
    %v358 = vld [vmem:[%s357] sm:$0xf]
    %359 = vrot.lane.b32.xlu0 %v350, 88
    %v360 = vpop.permute.xlu0 %359
    %v362 = vsel %vm181, %v358, %v360
    %v363 = vpack.c.bf16 %v362, %v362
    %v365 = vsel %vm199, %v363, 0
    %367 = vmatprep.subr.bf16.mxu0 0
    %368 = vmatpush1.bf16.msra.mxu0 %v196
    %369 = vmatprep.subr.bf16.mxu0 0
    %370 = vmatpush1.bf16.msra.mxu0 %v205
    %371 = vmatprep.subr.bf16.mxu0 0
    %372 = vmatpush1.bf16.msra.mxu0 0
    %373 = vmatprep.subr.bf16.mxu0 0
    %374 = vmatpush1.bf16.msra.mxu0 0
    %375 = vmatprep.subr.bf16.mxu0 0
    %376 = vmatpush1.bf16.msra.mxu0 0
    %377 = vmatprep.subr.bf16.mxu0 0
    %378 = vmatpush1.bf16.msra.mxu0 0
    %379 = vmatprep.subr.bf16.mxu0 0
    %380 = vmatpush1.bf16.msra.mxu0 0
    %381 = vmatprep.subr.bf16.mxu0 0
    %382 = vmatpush1.bf16.msra.mxu0 0
    %383 = vmatprep.subr.bf16.mxu0 0
    %384 = vmatpush1.bf16.msra.mxu0 0
    %385 = vmatprep.subr.bf16.mxu0 0
    %386 = vmatpush1.bf16.msra.mxu0 0
    %387 = vmatprep.subr.bf16.mxu0 0
    %388 = vmatpush1.bf16.msra.mxu0 0
    %389 = vmatprep.subr.bf16.mxu0 0
    %390 = vmatpush1.bf16.msra.mxu0 0
    %391 = vmatprep.subr.bf16.mxu0 0
    %392 = vmatpush1.bf16.msra.mxu0 0
    %393 = vmatprep.subr.bf16.mxu0 0
    %394 = vmatpush1.bf16.msra.mxu0 0
    %395 = vmatprep.subr.bf16.mxu0 0
    %396 = vmatpush1.bf16.msra.mxu0 0
    %397 = vmatprep.subr.bf16.mxu0 0
    %398 = vmatpush1.bf16.msra.mxu0 0
    %399 = vmatprep.mubr.bf16.mxu0 0
    %400 = vmatmul.mubr.bf16.gmra.mrb[0].mxu0 %v365
    %v401 = vpop.f32.mrb[0].mxu0
    %v402 = vadd.f32 %v188, %v401
    %v403 = vpop.f32.mrb[0].mxu0
    %v404 = vpop.f32.mrb[0].mxu0
    %v405 = vpop.f32.mrb[0].mxu0
    %406 = vdwg.mxu0
    %v407 = vxor.u32 %v402, 2147483648
    %v408 = vmul.f32 %v407, 1.442695
    %v409 = vpow.pop %v408
    %v410 = vadd.f32 %v409, 1.0
    %v411 = vrcp.pop %v410
    %v412 = vmul.f32 1.0, %v411
    %v413 = vtanh.pop %v402
    %v414 = vmul.f32 %v412, %v344
    %416 = vrot.lane.b32.xlu0 %v413, 96
    %v417 = vpop.permute.xlu0 %416
    %v419 = vmul.f32 %v412, %v417
    %421 = vrot.lane.b32.xlu0 %v419, 16
    %v422 = vpop.permute.xlu0 %421
    %v424 = vadd.f32 %v414, %v422
    %v425 = vtanh.pop %v424
    %427 = vrot.lane.b32.xlu0 %v425, 32
    %v428 = vpop.permute.xlu0 %427
    %v430 = vmul.f32 %v412, %v428
    %432 = vrot.lane.b32.xlu0 %v430, 80
    %v433 = vpop.permute.xlu0 %432
    %s435 = scalar_lea.vmem [#allocation2], 8
    %436 = vst.msk [vmem:[%s435] sm:$0xf] %vm275, %v433
    %s437 = scalar_lea.vmem %s4, 12
    %v438 = vld [vmem:[%s437] sm:$0xf]
    %439 = vrot.lane.b32.xlu0 %v430, 88
    %v440 = vpop.permute.xlu0 %439
    %v442 = vsel %vm181, %v438, %v440
    %v443 = vpack.c.bf16 %v442, %v442
    %v445 = vsel %vm199, %v443, 0
    %447 = vmatprep.subr.bf16.mxu0 0
    %448 = vmatpush1.bf16.msra.mxu0 %v196
    %449 = vmatprep.subr.bf16.mxu0 0
    %450 = vmatpush1.bf16.msra.mxu0 %v205
    %451 = vmatprep.subr.bf16.mxu0 0
    %452 = vmatpush1.bf16.msra.mxu0 0
    %453 = vmatprep.subr.bf16.mxu0 0
    %454 = vmatpush1.bf16.msra.mxu0 0
    %455 = vmatprep.subr.bf16.mxu0 0
    %456 = vmatpush1.bf16.msra.mxu0 0
    %457 = vmatprep.subr.bf16.mxu0 0
    %458 = vmatpush1.bf16.msra.mxu0 0
    %459 = vmatprep.subr.bf16.mxu0 0
    %460 = vmatpush1.bf16.msra.mxu0 0
    %461 = vmatprep.subr.bf16.mxu0 0
    %462 = vmatpush1.bf16.msra.mxu0 0
    %463 = vmatprep.subr.bf16.mxu0 0
    %464 = vmatpush1.bf16.msra.mxu0 0
    %465 = vmatprep.subr.bf16.mxu0 0
    %466 = vmatpush1.bf16.msra.mxu0 0
    %467 = vmatprep.subr.bf16.mxu0 0
    %468 = vmatpush1.bf16.msra.mxu0 0
    %469 = vmatprep.subr.bf16.mxu0 0
    %470 = vmatpush1.bf16.msra.mxu0 0
    %471 = vmatprep.subr.bf16.mxu0 0
    %472 = vmatpush1.bf16.msra.mxu0 0
    %473 = vmatprep.subr.bf16.mxu0 0
    %474 = vmatpush1.bf16.msra.mxu0 0
    %475 = vmatprep.subr.bf16.mxu0 0
    %476 = vmatpush1.bf16.msra.mxu0 0
    %477 = vmatprep.subr.bf16.mxu0 0
    %478 = vmatpush1.bf16.msra.mxu0 0
    %479 = vmatprep.mubr.bf16.mxu0 0
    %480 = vmatmul.mubr.bf16.gmra.mrb[0].mxu0 %v445
    %v481 = vpop.f32.mrb[0].mxu0
    %v482 = vadd.f32 %v188, %v481
    %v483 = vpop.f32.mrb[0].mxu0
    %v484 = vpop.f32.mrb[0].mxu0
    %v485 = vpop.f32.mrb[0].mxu0
    %486 = vdwg.mxu0
    %v487 = vxor.u32 %v482, 2147483648
    %v488 = vmul.f32 %v487, 1.442695
    %v489 = vpow.pop %v488
    %v490 = vadd.f32 %v489, 1.0
    %v491 = vrcp.pop %v490
    %v492 = vmul.f32 1.0, %v491
    %v493 = vtanh.pop %v482
    %v494 = vmul.f32 %v492, %v424
    %496 = vrot.lane.b32.xlu0 %v493, 96
    %v497 = vpop.permute.xlu0 %496
    %v499 = vmul.f32 %v492, %v497
    %501 = vrot.lane.b32.xlu0 %v499, 16
    %v502 = vpop.permute.xlu0 %501
    %v504 = vadd.f32 %v494, %v502
    %v505 = vtanh.pop %v504
    %507 = vrot.lane.b32.xlu0 %v505, 32
    %v508 = vpop.permute.xlu0 %507
    %v510 = vmul.f32 %v492, %v508
    %512 = vrot.lane.b32.xlu0 %v510, 80
    %v513 = vpop.permute.xlu0 %512
    %s515 = scalar_lea.vmem [#allocation2], 12
    %516 = vst.msk [vmem:[%s515] sm:$0xf] %vm275, %v513
    %s517 = scalar_lea.vmem %s4, 16
    %v518 = vld [vmem:[%s517] sm:$0xf]
    %519 = vrot.lane.b32.xlu0 %v510, 88
    %v520 = vpop.permute.xlu0 %519
    %v522 = vsel %vm181, %v518, %v520
    %v523 = vpack.c.bf16 %v522, %v522
    %v525 = vsel %vm199, %v523, 0
    %527 = vmatprep.subr.bf16.mxu0 0
    %528 = vmatpush1.bf16.msra.mxu0 %v196
    %529 = vmatprep.subr.bf16.mxu0 0
    %530 = vmatpush1.bf16.msra.mxu0 %v205
    %531 = vmatprep.subr.bf16.mxu0 0
    %532 = vmatpush1.bf16.msra.mxu0 0
    %533 = vmatprep.subr.bf16.mxu0 0
    %534 = vmatpush1.bf16.msra.mxu0 0
    %535 = vmatprep.subr.bf16.mxu0 0
    %536 = vmatpush1.bf16.msra.mxu0 0
    %537 = vmatprep.subr.bf16.mxu0 0
    %538 = vmatpush1.bf16.msra.mxu0 0
    %539 = vmatprep.subr.bf16.mxu0 0
    %540 = vmatpush1.bf16.msra.mxu0 0
    %541 = vmatprep.subr.bf16.mxu0 0
    %542 = vmatpush1.bf16.msra.mxu0 0
    %543 = vmatprep.subr.bf16.mxu0 0
    %544 = vmatpush1.bf16.msra.mxu0 0
    %545 = vmatprep.subr.bf16.mxu0 0
    %546 = vmatpush1.bf16.msra.mxu0 0
    %547 = vmatprep.subr.bf16.mxu0 0
    %548 = vmatpush1.bf16.msra.mxu0 0
    %549 = vmatprep.subr.bf16.mxu0 0
    %550 = vmatpush1.bf16.msra.mxu0 0
    %551 = vmatprep.subr.bf16.mxu0 0
    %552 = vmatpush1.bf16.msra.mxu0 0
    %553 = vmatprep.subr.bf16.mxu0 0
    %554 = vmatpush1.bf16.msra.mxu0 0
    %555 = vmatprep.subr.bf16.mxu0 0
    %556 = vmatpush1.bf16.msra.mxu0 0
    %557 = vmatprep.subr.bf16.mxu0 0
    %558 = vmatpush1.bf16.msra.mxu0 0
    %559 = vmatprep.mubr.bf16.mxu0 0
    %560 = vmatmul.mubr.bf16.gmra.mrb[0].mxu0 %v525
    %v561 = vpop.f32.mrb[0].mxu0
    %v562 = vadd.f32 %v188, %v561
    %v563 = vpop.f32.mrb[0].mxu0
    %v564 = vpop.f32.mrb[0].mxu0
    %v565 = vpop.f32.mrb[0].mxu0
    %566 = vdwg.mxu0
    %v567 = vxor.u32 %v562, 2147483648
    %v568 = vmul.f32 %v567, 1.442695
    %v569 = vpow.pop %v568
    %v570 = vadd.f32 %v569, 1.0
    %v571 = vrcp.pop %v570
    %v572 = vmul.f32 1.0, %v571
    %v573 = vtanh.pop %v562
    %v574 = vmul.f32 %v572, %v504
    %576 = vrot.lane.b32.xlu0 %v573, 96
    %v577 = vpop.permute.xlu0 %576
    %v579 = vmul.f32 %v572, %v577
    %581 = vrot.lane.b32.xlu0 %v579, 16
    %v582 = vpop.permute.xlu0 %581
    %v584 = vadd.f32 %v574, %v582
    %v585 = vtanh.pop %v584
    %587 = vrot.lane.b32.xlu0 %v585, 32
    %v588 = vpop.permute.xlu0 %587
    %v590 = vmul.f32 %v572, %v588
    %592 = vrot.lane.b32.xlu0 %v590, 80
    %v593 = vpop.permute.xlu0 %592
    %s595 = scalar_lea.vmem [#allocation2], 16
    %596 = vst.msk [vmem:[%s595] sm:$0xf] %vm275, %v593
    %s597 = scalar_lea.vmem %s4, 20
    %v598 = vld [vmem:[%s597] sm:$0xf]
    %599 = vrot.lane.b32.xlu0 %v590, 88
    %v600 = vpop.permute.xlu0 %599
    %v602 = vsel %vm181, %v598, %v600
    %v603 = vpack.c.bf16 %v602, %v602
    %v605 = vsel %vm199, %v603, 0
    %607 = vmatprep.subr.bf16.mxu0 0
    %608 = vmatpush1.bf16.msra.mxu0 %v196
    %609 = vmatprep.subr.bf16.mxu0 0
    %610 = vmatpush1.bf16.msra.mxu0 %v205
    %611 = vmatprep.subr.bf16.mxu0 0
    %612 = vmatpush1.bf16.msra.mxu0 0
    %613 = vmatprep.subr.bf16.mxu0 0
    %614 = vmatpush1.bf16.msra.mxu0 0
    %615 = vmatprep.subr.bf16.mxu0 0
    %616 = vmatpush1.bf16.msra.mxu0 0
    %617 = vmatprep.subr.bf16.mxu0 0
    %618 = vmatpush1.bf16.msra.mxu0 0
    %619 = vmatprep.subr.bf16.mxu0 0
    %620 = vmatpush1.bf16.msra.mxu0 0
    %621 = vmatprep.subr.bf16.mxu0 0
    %622 = vmatpush1.bf16.msra.mxu0 0
    %623 = vmatprep.subr.bf16.mxu0 0
    %624 = vmatpush1.bf16.msra.mxu0 0
    %625 = vmatprep.subr.bf16.mxu0 0
    %626 = vmatpush1.bf16.msra.mxu0 0
    %627 = vmatprep.subr.bf16.mxu0 0
    %628 = vmatpush1.bf16.msra.mxu0 0
    %629 = vmatprep.subr.bf16.mxu0 0
    %630 = vmatpush1.bf16.msra.mxu0 0
    %631 = vmatprep.subr.bf16.mxu0 0
    %632 = vmatpush1.bf16.msra.mxu0 0
    %633 = vmatprep.subr.bf16.mxu0 0
    %634 = vmatpush1.bf16.msra.mxu0 0
    %635 = vmatprep.subr.bf16.mxu0 0
    %636 = vmatpush1.bf16.msra.mxu0 0
    %637 = vmatprep.subr.bf16.mxu0 0
    %638 = vmatpush1.bf16.msra.mxu0 0
    %639 = vmatprep.mubr.bf16.mxu0 0
    %640 = vmatmul.mubr.bf16.gmra.mrb[0].mxu0 %v605
    %v641 = vpop.f32.mrb[0].mxu0
    %v642 = vadd.f32 %v188, %v641
    %v643 = vpop.f32.mrb[0].mxu0
    %v644 = vpop.f32.mrb[0].mxu0
    %v645 = vpop.f32.mrb[0].mxu0
    %646 = vdwg.mxu0
    %v647 = vxor.u32 %v642, 2147483648
    %v648 = vmul.f32 %v647, 1.442695
    %v649 = vpow.pop %v648
    %v650 = vadd.f32 %v649, 1.0
    %v651 = vrcp.pop %v650
    %v652 = vmul.f32 1.0, %v651
    %v653 = vtanh.pop %v642
    %v654 = vmul.f32 %v652, %v584
    %656 = vrot.lane.b32.xlu0 %v653, 96
    %v657 = vpop.permute.xlu0 %656
    %v659 = vmul.f32 %v652, %v657
    %661 = vrot.lane.b32.xlu0 %v659, 16
    %v662 = vpop.permute.xlu0 %661
    %v664 = vadd.f32 %v654, %v662
    %v665 = vtanh.pop %v664
    %667 = vrot.lane.b32.xlu0 %v665, 32
    %v668 = vpop.permute.xlu0 %667
    %v670 = vmul.f32 %v652, %v668
    %672 = vrot.lane.b32.xlu0 %v670, 80
    %v673 = vpop.permute.xlu0 %672
    %s675 = scalar_lea.vmem [#allocation2], 20
    %676 = vst.msk [vmem:[%s675] sm:$0xf] %vm275, %v673
    %s677 = scalar_lea.vmem %s4, 24
    %v678 = vld [vmem:[%s677] sm:$0xf]
    %679 = vrot.lane.b32.xlu0 %v670, 88
    %v680 = vpop.permute.xlu0 %679
    %v682 = vsel %vm181, %v678, %v680
    %v683 = vpack.c.bf16 %v682, %v682
    %v685 = vsel %vm199, %v683, 0
    %687 = vmatprep.subr.bf16.mxu0 0
    %688 = vmatpush1.bf16.msra.mxu0 %v196
    %689 = vmatprep.subr.bf16.mxu0 0
    %690 = vmatpush1.bf16.msra.mxu0 %v205
    %691 = vmatprep.subr.bf16.mxu0 0
    %692 = vmatpush1.bf16.msra.mxu0 0
    %693 = vmatprep.subr.bf16.mxu0 0
    %694 = vmatpush1.bf16.msra.mxu0 0
    %695 = vmatprep.subr.bf16.mxu0 0
    %696 = vmatpush1.bf16.msra.mxu0 0
    %697 = vmatprep.subr.bf16.mxu0 0
    %698 = vmatpush1.bf16.msra.mxu0 0
    %699 = vmatprep.subr.bf16.mxu0 0
    %700 = vmatpush1.bf16.msra.mxu0 0
    %701 = vmatprep.subr.bf16.mxu0 0
    %702 = vmatpush1.bf16.msra.mxu0 0
    %703 = vmatprep.subr.bf16.mxu0 0
    %704 = vmatpush1.bf16.msra.mxu0 0
    %705 = vmatprep.subr.bf16.mxu0 0
    %706 = vmatpush1.bf16.msra.mxu0 0
    %707 = vmatprep.subr.bf16.mxu0 0
    %708 = vmatpush1.bf16.msra.mxu0 0
    %709 = vmatprep.subr.bf16.mxu0 0
    %710 = vmatpush1.bf16.msra.mxu0 0
    %711 = vmatprep.subr.bf16.mxu0 0
    %712 = vmatpush1.bf16.msra.mxu0 0
    %713 = vmatprep.subr.bf16.mxu0 0
    %714 = vmatpush1.bf16.msra.mxu0 0
    %715 = vmatprep.subr.bf16.mxu0 0
    %716 = vmatpush1.bf16.msra.mxu0 0
    %717 = vmatprep.subr.bf16.mxu0 0
    %718 = vmatpush1.bf16.msra.mxu0 0
    %719 = vmatprep.mubr.bf16.mxu0 0
    %720 = vmatmul.mubr.bf16.gmra.mrb[0].mxu0 %v685
    %v721 = vpop.f32.mrb[0].mxu0
    %v722 = vadd.f32 %v188, %v721
    %v723 = vpop.f32.mrb[0].mxu0
    %v724 = vpop.f32.mrb[0].mxu0
    %v725 = vpop.f32.mrb[0].mxu0
    %726 = vdwg.mxu0
    %v727 = vxor.u32 %v722, 2147483648
    %v728 = vmul.f32 %v727, 1.442695
    %v729 = vpow.pop %v728
    %v730 = vadd.f32 %v729, 1.0
    %v731 = vrcp.pop %v730
    %v732 = vmul.f32 1.0, %v731
    %v733 = vtanh.pop %v722
    %v734 = vmul.f32 %v732, %v664
    %736 = vrot.lane.b32.xlu0 %v733, 96
    %v737 = vpop.permute.xlu0 %736
    %v739 = vmul.f32 %v732, %v737
    %741 = vrot.lane.b32.xlu0 %v739, 16
    %v742 = vpop.permute.xlu0 %741
    %v744 = vadd.f32 %v734, %v742
    %v745 = vtanh.pop %v744
    %747 = vrot.lane.b32.xlu0 %v745, 32
    %v748 = vpop.permute.xlu0 %747
    %v750 = vmul.f32 %v732, %v748
    %752 = vrot.lane.b32.xlu0 %v750, 80
    %v753 = vpop.permute.xlu0 %752
    %s755 = scalar_lea.vmem [#allocation2], 24
    %756 = vst.msk [vmem:[%s755] sm:$0xf] %vm275, %v753
    %s757 = scalar_lea.vmem %s4, 28
    %v758 = vld [vmem:[%s757] sm:$0xf]
    %759 = vrot.lane.b32.xlu0 %v750, 88
    %v760 = vpop.permute.xlu0 %759
    %v762 = vsel %vm181, %v758, %v760
    %v763 = vpack.c.bf16 %v762, %v762
    %v765 = vsel %vm199, %v763, 0
    %767 = vmatprep.subr.bf16.mxu0 0
    %768 = vmatpush1.bf16.msra.mxu0 %v196
    %769 = vmatprep.subr.bf16.mxu0 0
    %770 = vmatpush1.bf16.msra.mxu0 %v205
    %771 = vmatprep.subr.bf16.mxu0 0
    %772 = vmatpush1.bf16.msra.mxu0 0
    %773 = vmatprep.subr.bf16.mxu0 0
    %774 = vmatpush1.bf16.msra.mxu0 0
    %775 = vmatprep.subr.bf16.mxu0 0
    %776 = vmatpush1.bf16.msra.mxu0 0
    %777 = vmatprep.subr.bf16.mxu0 0
    %778 = vmatpush1.bf16.msra.mxu0 0
    %779 = vmatprep.subr.bf16.mxu0 0
    %780 = vmatpush1.bf16.msra.mxu0 0
    %781 = vmatprep.subr.bf16.mxu0 0
    %782 = vmatpush1.bf16.msra.mxu0 0
    %783 = vmatprep.subr.bf16.mxu0 0
    %784 = vmatpush1.bf16.msra.mxu0 0
    %785 = vmatprep.subr.bf16.mxu0 0
    %786 = vmatpush1.bf16.msra.mxu0 0
    %787 = vmatprep.subr.bf16.mxu0 0
    %788 = vmatpush1.bf16.msra.mxu0 0
    %789 = vmatprep.subr.bf16.mxu0 0
    %790 = vmatpush1.bf16.msra.mxu0 0
    %791 = vmatprep.subr.bf16.mxu0 0
    %792 = vmatpush1.bf16.msra.mxu0 0
    %793 = vmatprep.subr.bf16.mxu0 0
    %794 = vmatpush1.bf16.msra.mxu0 0
    %795 = vmatprep.subr.bf16.mxu0 0
    %796 = vmatpush1.bf16.msra.mxu0 0
    %797 = vmatprep.subr.bf16.mxu0 0
    %798 = vmatpush1.bf16.msra.mxu0 0
    %799 = vmatprep.mubr.bf16.mxu0 0
    %800 = vmatmul.mubr.bf16.gmra.mrb[0].mxu0 %v765
    %v801 = vpop.f32.mrb[0].mxu0
    %v802 = vadd.f32 %v188, %v801
    %v803 = vpop.f32.mrb[0].mxu0
    %v804 = vpop.f32.mrb[0].mxu0
    %v805 = vpop.f32.mrb[0].mxu0
    %806 = vdwg.mxu0
    %v807 = vxor.u32 %v802, 2147483648
    %v808 = vmul.f32 %v807, 1.442695
    %v809 = vpow.pop %v808
    %v810 = vadd.f32 %v809, 1.0
    %v811 = vrcp.pop %v810
    %v812 = vmul.f32 1.0, %v811
    %v813 = vtanh.pop %v802
    %v814 = vmul.f32 %v812, %v744
    %816 = vrot.lane.b32.xlu0 %v813, 96
    %v817 = vpop.permute.xlu0 %816
    %v819 = vmul.f32 %v812, %v817
    %821 = vrot.lane.b32.xlu0 %v819, 16
    %v822 = vpop.permute.xlu0 %821
    %v824 = vadd.f32 %v814, %v822
    %v825 = vtanh.pop %v824
    %827 = vrot.lane.b32.xlu0 %v825, 32
    %v828 = vpop.permute.xlu0 %827
    %v830 = vmul.f32 %v812, %v828
    %832 = vrot.lane.b32.xlu0 %v830, 80
    %v833 = vpop.permute.xlu0 %832
    %s835 = scalar_lea.vmem [#allocation2], 28
    %836 = vst.msk [vmem:[%s835] sm:$0xf] %vm275, %v833
    %s837 = scalar_lea.vmem %s4, 32
    %v838 = vld [vmem:[%s837] sm:$0xf]
    %839 = vrot.lane.b32.xlu0 %v830, 88
    %v840 = vpop.permute.xlu0 %839
    %v842 = vsel %vm181, %v838, %v840
    %v843 = vpack.c.bf16 %v842, %v842
    %v845 = vsel %vm199, %v843, 0
    %847 = vmatprep.subr.bf16.mxu0 0
    %848 = vmatpush1.bf16.msra.mxu0 %v196
    %849 = vmatprep.subr.bf16.mxu0 0
    %850 = vmatpush1.bf16.msra.mxu0 %v205
    %851 = vmatprep.subr.bf16.mxu0 0
    %852 = vmatpush1.bf16.msra.mxu0 0
    %853 = vmatprep.subr.bf16.mxu0 0
    %854 = vmatpush1.bf16.msra.mxu0 0
    %855 = vmatprep.subr.bf16.mxu0 0
    %856 = vmatpush1.bf16.msra.mxu0 0
    %857 = vmatprep.subr.bf16.mxu0 0
    %858 = vmatpush1.bf16.msra.mxu0 0
    %859 = vmatprep.subr.bf16.mxu0 0
    %860 = vmatpush1.bf16.msra.mxu0 0
    %861 = vmatprep.subr.bf16.mxu0 0
    %862 = vmatpush1.bf16.msra.mxu0 0
    %863 = vmatprep.subr.bf16.mxu0 0
    %864 = vmatpush1.bf16.msra.mxu0 0
    %865 = vmatprep.subr.bf16.mxu0 0
    %866 = vmatpush1.bf16.msra.mxu0 0
    %867 = vmatprep.subr.bf16.mxu0 0
    %868 = vmatpush1.bf16.msra.mxu0 0
    %869 = vmatprep.subr.bf16.mxu0 0
    %870 = vmatpush1.bf16.msra.mxu0 0
    %871 = vmatprep.subr.bf16.mxu0 0
    %872 = vmatpush1.bf16.msra.mxu0 0
    %873 = vmatprep.subr.bf16.mxu0 0
    %874 = vmatpush1.bf16.msra.mxu0 0
    %875 = vmatprep.subr.bf16.mxu0 0
    %876 = vmatpush1.bf16.msra.mxu0 0
    %877 = vmatprep.subr.bf16.mxu0 0
    %878 = vmatpush1.bf16.msra.mxu0 0
    %879 = vmatprep.mubr.bf16.mxu0 0
    %880 = vmatmul.mubr.bf16.gmra.mrb[0].mxu0 %v845
    %v881 = vpop.f32.mrb[0].mxu0
    %v882 = vadd.f32 %v188, %v881
    %v883 = vpop.f32.mrb[0].mxu0
    %v884 = vpop.f32.mrb[0].mxu0
    %v885 = vpop.f32.mrb[0].mxu0
    %886 = vdwg.mxu0
    %v887 = vxor.u32 %v882, 2147483648
    %v888 = vmul.f32 %v887, 1.442695
    %v889 = vpow.pop %v888
    %v890 = vadd.f32 %v889, 1.0
    %v891 = vrcp.pop %v890
    %v892 = vmul.f32 1.0, %v891
    %v893 = vtanh.pop %v882
    %v894 = vmul.f32 %v892, %v824
    %896 = vrot.lane.b32.xlu0 %v893, 96
    %v897 = vpop.permute.xlu0 %896
    %v899 = vmul.f32 %v892, %v897
    %901 = vrot.lane.b32.xlu0 %v899, 16
    %v902 = vpop.permute.xlu0 %901
    %v904 = vadd.f32 %v894, %v902
    %v905 = vtanh.pop %v904
    %907 = vrot.lane.b32.xlu0 %v905, 32
    %v908 = vpop.permute.xlu0 %907
    %v910 = vmul.f32 %v892, %v908
    %912 = vrot.lane.b32.xlu0 %v910, 80
    %v913 = vpop.permute.xlu0 %912
    %s915 = scalar_lea.vmem [#allocation2], 32
    %916 = vst.msk [vmem:[%s915] sm:$0xf] %vm275, %v913
    // Predicated region
    $region18: #{tpu_custom_call.1} parent=1 // pred_check
      _
    $region19: #{tpu_custom_call.1} parent=1 // pred_check_branch
      %918 = sbr.rel (0) target = $region21
    $region20: #{tpu_custom_call.1} parent=1 // pred_region
      _
    $region21: #{tpu_custom_call.1} parent=1 // pred_fallthru
      _
    // Predicated region
    $region22: #{tpu_custom_call.1} parent=1 // pred_check
      _
    $region23: #{tpu_custom_call.1} parent=1 // pred_check_branch
      %920 = sbr.rel (0) target = $region25
    $region24: #{tpu_custom_call.1} parent=1 // pred_region
      %s922 = ssub.s32 576, 576
      %923 = vsyncadd [#allocation3], %s922
      %s924 = sshll.u32 [#allocation2], 4
      %s925 = int_to_ptr.vmem [resolvable:$true] %s924
      %930 = dma.vmem_to_hbm [thread:$0]  %s925, 576, %s5, [#allocation3], 64, 64, 4
    $region25: #{tpu_custom_call.1} parent=1 // pred_fallthru
      _
    // Predicated region
    $region26: #{tpu_custom_call.1} parent=1 // pred_check
      _
    $region27: #{tpu_custom_call.1} parent=1 // pred_check_branch
      %932 = sbr.rel (0) target = $region29
    $region28: #{tpu_custom_call.1} parent=1 // pred_region
      _
    $region29: #{tpu_custom_call.1} parent=1 // pred_fallthru
      _
    // Predicated region
    $region30: #{tpu_custom_call.1} parent=1 // pred_check
      _
    $region31: #{tpu_custom_call.1} parent=1 // pred_check_branch
      %934 = sbr.rel (0) target = $region33
    $region32: #{tpu_custom_call.1} parent=1 // pred_region
      %935 = dma.done [#allocation3], 576
    $region33: #{tpu_custom_call.1} parent=1 // pred_fallthru
      _
    %936 = vsyncpa [#allocation3], 1

</llo_original>
